<compile_context>
chip_gen: v7x
topology: tpu7x:2x2x1
jax: 0.10.0
libtpu: 0.0.40
codegen_flags: <defaults>
</compile_context>

<pallas_src>
import functools

import numpy as np
import jax
import jax.numpy as jnp
from jax.experimental import pallas as pl
from jax.experimental.pallas import tpu as pltpu

NUM_CLASSES = 4
NUM_QUERIES = 16
NUM_DN = 16
NUM_BODY_POINTS = 17
FOCAL_ALPHA = 0.25
OKS_EPS = 1e-6
GIOU_EPS = 1e-7
LANES = 128

# COCO keypoint sigmas (OKSLoss.__init__ for num_keypoints=17)
COCO_SIGMAS_NP = np.array(
    [.26, .25, .25, .35, .35, .79, .79, .72, .72, .62, .62,
     1.07, 1.07, .87, .87, .89, .89], dtype=np.float32) / 10.0

_VMEM = pltpu.MemorySpace.VMEM

# packed-output lane slots (already-normalized, final loss values)
_S_LOSS_CE, _S_CLASS_ERR, _S_CARD_ERR = 0, 1, 2
_S_LOSS_BBOX, _S_LOSS_GIOU = 3, 4
_S_LOSS_KPT, _S_LOSS_OKS = 5, 6
_S_DN_CE, _S_DN_BBOX, _S_DN_GIOU = 7, 8, 9
_N_OUT = 10


# ---------------------------------------------------------------------------
# in-kernel helpers (pure jnp, traced inside the kernel body)
# ---------------------------------------------------------------------------
def _focal_sum(x, t, alpha):
    """sum of sigmoid focal loss (gamma=2) over all elements."""
    e = jnp.exp(-jnp.abs(x))                      # single shared EUP exp
    one_p_e = 1.0 + e
    inv = 1.0 / one_p_e                           # exact (review accuracy concern)
    prob = jnp.where(x >= 0.0, inv, e * inv)      # sigmoid without a second exp
    ce = jnp.maximum(x, 0.0) - x * t + jnp.log(one_p_e)   # stable BCE-with-logits
    p_t = prob * t + (1.0 - prob) * (1.0 - t)
    q = 1.0 - p_t
    a_t = alpha * t + (1.0 - alpha) * (1.0 - t)
    return jnp.sum(a_t * ce * q * q)              # gamma == 2 -> explicit square


def _box_sums(sb, tb, m):
    """masked sums of per-pair L1 and (1 - GIoU); boxes are (..., 4) cxcywh."""
    l1 = jnp.sum(jnp.abs(sb - tb), axis=-1, keepdims=True)
    # NOTE(scaling): at Q>=128 put the 4 components on >=8 sublane planes so these
    # ~35 VPU ops fill whole vregs; at the current sizes lane-sparse slices are free.
    scx, scy, sw, sh = sb[..., 0:1], sb[..., 1:2], sb[..., 2:3], sb[..., 3:4]
    tcx, tcy, tw, th = tb[..., 0:1], tb[..., 1:2], tb[..., 2:3], tb[..., 3:4]
    sx0, sy0 = scx - 0.5 * sw, scy - 0.5 * sh
    sx1, sy1 = scx + 0.5 * sw, scy + 0.5 * sh
    tx0, ty0 = tcx - 0.5 * tw, tcy - 0.5 * th
    tx1, ty1 = tcx + 0.5 * tw, tcy + 0.5 * th
    area_s = (sx1 - sx0) * (sy1 - sy0)
    area_t = (tx1 - tx0) * (ty1 - ty0)
    iw = jnp.maximum(jnp.minimum(sx1, tx1) - jnp.maximum(sx0, tx0), 0.0)
    ih = jnp.maximum(jnp.minimum(sy1, ty1) - jnp.maximum(sy0, ty0), 0.0)
    inter = iw * ih
    union = area_s + area_t - inter
    iou = inter * pl.reciprocal(union + GIOU_EPS, approx=True)
    cw = jnp.maximum(sx1, tx1) - jnp.minimum(sx0, tx0)
    ch = jnp.maximum(sy1, ty1) - jnp.minimum(sy0, ty0)
    carea = cw * ch
    giou = iou - (carea - union) * pl.reciprocal(carea + GIOU_EPS, approx=True)
    return jnp.sum(l1 * m), jnp.sum((1.0 - giou) * m)


# ---------------------------------------------------------------------------
# Fused criterion kernel.
#
# meta_ref   : (B, 8)        col0=tgt_len per image, col1=num_boxes, col2=num_tgt
# logits_ref : (B, Q, C)     pred_logits (direct)
# tcls_ref   : (B, Q, 1) i32 target class per query (C = "no object" sentinel)
# match_ref  : (B, Q, 1)     1.0 where the query is matched
# pbox_ref   : (B, Q, 4)     pred_boxes (direct)
# tbox_ref   : (B, Q, 4)     target box per query
# kpt_ref    : (B*Q, 3K)     pred_keypoints (direct, leading dims merged)
# zg_ref     : (B*Q, 2K)     target keypoint coords (interleaved x,y)
# vk_ref     : (B*Q, K)      target visibility (0 for unmatched rows)
# invs_ref   : (B*Q, K)      1 / (2 * area * var_k)   (1.0 for unmatched rows)
# kmask_ref  : (B*Q, 1)      instance (match) mask
# pair_ref   : (2K, K)       constant pairing matrix: (2k,k)=(2k+1,k)=1
# dnlogit_ref: (B, ND, C)    dn_class_pred (direct)
# dnlbl_ref  : (B, ND, 1) i32 dn_class_input (direct)
# dnsbox_ref : (B, ND, 4)    dn_bbox_pred (direct)
# dntbox_ref : (B, ND, 4)    dn_bbox_input (direct)
# out_ref    : (1, 128)      lane-packed final losses (slots above)
# ---------------------------------------------------------------------------
def _fused_criterion_kernel(alpha,
                            meta_ref, logits_ref, tcls_ref, match_ref,
                            pbox_ref, tbox_ref,
                            kpt_ref, zg_ref, vk_ref, invs_ref, kmask_ref, pair_ref,
                            dnlogit_ref, dnlbl_ref, dnsbox_ref, dntbox_ref,
                            out_ref):
    f32 = jnp.float32
    B, Q, C = logits_ref.shape
    _, ND, _ = dnlogit_ref.shape
    TWO_K = zg_ref.shape[-1]

    meta = meta_ref[...]                               # (B, 8)
    inv_num_boxes = 1.0 / meta[0:1, 1:2]               # (1, 1)
    inv_num_tgt = 1.0 / meta[0:1, 2:3]

    # ---------------- focal classification (main) + class / cardinality errors
    x = logits_ref[...]
    cls_iota = jax.lax.broadcasted_iota(jnp.int32, (B, Q, C), 2)
    t = (cls_iota == tcls_ref[...]).astype(f32)        # in-kernel one-hot (sentinel C -> 0s)
    mq = match_ref[...]                                # (B, Q, 1)

    loss_ce = _focal_sum(x, t, alpha) * inv_num_boxes

    # class_error: argmax-free top-1 (logit at target class vs row max; ties count correct)
    sel = jnp.sum(x * t, axis=-1, keepdims=True)
    mx = jnp.max(x, axis=-1, keepdims=True)
    correct = (sel >= mx).astype(f32)
    n_match = jnp.maximum(jnp.sum(mq), 1.0)
    class_err = 100.0 * (1.0 - jnp.sum(correct * mq) / n_match)

    # cardinality_error: argmax != C-1  <=>  max over classes < C-1 >= logit[C-1]
    m_other = jnp.max(jnp.where(cls_iota < C - 1, x, -1e30), axis=-1, keepdims=True)
    not_empty = (m_other >= x[:, :, C - 1:C]).astype(f32)     # (B, Q, 1)
    card_err = jnp.zeros((1, 1), f32)
    for b in range(B):                                        # B is small & static
        card_b = jnp.sum(not_empty[b:b + 1])
        card_err = card_err + jnp.abs(card_b - meta[b:b + 1, 0:1])
    card_err = card_err * (1.0 / B)

    # ---------------- boxes (main) ------------------------------------------
    l1_main, giou_main = _box_sums(pbox_ref[...], tbox_ref[...], mq)
    loss_bbox = l1_main * inv_num_boxes
    loss_giou = giou_main * inv_num_boxes

    # ---------------- keypoints: L1 + OKS -------------------------------------
    zp = kpt_ref[:, 0:TWO_K]                           # pred (x,y) interleaved
    diff = zp - zg_ref[...]
    pair = pair_ref[...]                               # (2K, K) constant selector
    absp = jnp.dot(jnp.abs(diff), pair, preferred_element_type=f32)   # |dx|+|dy| per kpt
    d2 = jnp.dot(diff * diff, pair, preferred_element_type=f32)       # dx^2+dy^2 per kpt
    vk = vk_ref[...]
    mk = kmask_ref[...]
    pose_sum = jnp.sum(absp * vk)
    valid_pts = jnp.maximum(jnp.sum(vk) * 2.0, 1.0)
    e_oks = jnp.exp(-d2 * invs_ref[...]) * vk
    v_sum = jnp.sum(vk, axis=-1, keepdims=True)
    oks = jnp.sum(e_oks, axis=-1, keepdims=True) * pl.reciprocal(v_sum + OKS_EPS,
                                                                 approx=True)
    oks = jnp.maximum(oks, OKS_EPS)
    kcount = jnp.maximum(jnp.sum(mk), 1.0)
    loss_kpt = pose_sum / valid_pts
    loss_oks = (jnp.sum((1.0 - oks) * mk) / kcount) / valid_pts

    # ---------------- dn (denoising) branch -----------------------------------
    xd = dnlogit_ref[...]
    dn_iota = jax.lax.broadcasted_iota(jnp.int32, (B, ND, C), 2)
    td = (dn_iota == dnlbl_ref[...]).astype(f32)
    dn_ce = _focal_sum(xd, td, alpha) * inv_num_tgt
    l1_dn, giou_dn = _box_sums(dnsbox_ref[...], dntbox_ref[...],
                               jnp.ones((B, ND, 1), f32))
    dn_bbox = l1_dn * inv_num_tgt
    dn_giou = giou_dn * inv_num_tgt

    # ---------------- pack the 10 final losses into one lane-dense row ---------
    # (kept as a vector select-chain: proven to lower; scalar SMEM stores of
    #  vector-derived values were considered but are a lowering risk)
    lane = jax.lax.broadcasted_iota(jnp.int32, (1, LANES), 1)
    vals = (loss_ce, class_err, card_err, loss_bbox, loss_giou,
            loss_kpt, loss_oks, dn_ce, dn_bbox, dn_giou)
    acc = jnp.zeros((1, LANES), jnp.float32)
    for i, v in enumerate(vals):
        acc = acc + jnp.where(lane == i, v, 0.0)
    out_ref[...] = acc


@functools.partial(jax.jit, static_argnames=('alpha',))
def _fused_criterion(meta, logits, tcls, match, pbox, tbox,
                     kpt, zg, vk, invs, kmask, pair,
                     dnlogit, dnlbl, dnsbox, dntbox, *, alpha):
    out = pl.pallas_call(
        functools.partial(_fused_criterion_kernel, float(alpha)),
        out_shape=jax.ShapeDtypeStruct((1, LANES), jnp.float32),
        in_specs=[pl.BlockSpec(memory_space=_VMEM)] * 16,
        out_specs=pl.BlockSpec(memory_space=_VMEM),
    )(meta, logits, tcls, match, pbox, tbox,
      kpt, zg, vk, invs, kmask, pair, dnlogit, dnlbl, dnsbox, dntbox)
    row = out[0]
    return tuple(row[i] for i in range(_N_OUT))   # slicing fused into the same jit


def _as_f32(x):
    x = jnp.asarray(x)
    return x if x.dtype == jnp.float32 else x.astype(jnp.float32)


# ---------------------------------------------------------------------------
# Matcher (external dependency of SetCriterion). Host-side like the reference.
# TODO(synk): Hungarian matching (scipy linear_sum_assignment) has no clean Pallas
#             equivalent; a deterministic identity matcher is used instead.
def identity_matcher(outputs, targets):
    indices = []
    for t in targets:
        n = int(np.asarray(t['labels']).shape[0])
        idx = np.arange(n, dtype=np.int64)
        indices.append((idx, idx))
    return indices, {}


# ---------------------------------------------------------------------------
# SetCriterion (JAX/Pallas version)
# ---------------------------------------------------------------------------
class SetCriterionPallas:
    def __init__(self, num_classes, matcher, weight_dict, focal_alpha, losses,
                 num_box_decoder_layers=2, num_body_points=17):
        assert num_body_points == 17, "COCO sigmas defined for 17 keypoints"
        self.num_classes = num_classes
        self.matcher = matcher
        self.weight_dict = weight_dict
        self.losses = losses
        self.focal_alpha = float(focal_alpha)
        self.num_body_points = num_body_points
        self.num_box_decoder_layers = num_box_decoder_layers
        self.vis = 0.1
        self.abs = 1
        self.sigmas = COCO_SIGMAS_NP
        # constant (x,y)->keypoint pairing selector, used by the in-kernel matmul
        K = num_body_points
        P = np.zeros((2 * K, K), np.float32)
        P[np.arange(K) * 2, np.arange(K)] = 1.0
        P[np.arange(K) * 2 + 1, np.arange(K)] = 1.0
        self._pair = jnp.asarray(P)

    # ---------- host-side (NumPy) target scattering: zero XLA ops, fixed shapes
    def _prepare_host_inputs(self, targets, indices, B, Q, num_boxes, num_tgt):
        K = self.num_body_points
        var = (self.sigmas * 2.0) ** 2                    # (K,)
        tcls = np.full((B, Q, 1), self.num_classes, np.int32)
        match = np.zeros((B, Q, 1), np.float32)
        tbox = np.zeros((B, Q, 4), np.float32)
        zg = np.zeros((B * Q, 2 * K), np.float32)
        vk = np.zeros((B * Q, K), np.float32)
        invs = np.ones((B * Q, K), np.float32)            # 1.0 pad -> safe exp argument
        kmask = np.zeros((B * Q, 1), np.float32)
        meta = np.zeros((B, 8), np.float32)
        meta[:, 1] = num_boxes
        meta[:, 2] = num_tgt
        for b, ((src, tgt), t) in enumerate(zip(indices, targets)):
            labels = np.asarray(t['labels'])
            meta[b, 0] = float(labels.shape[0])
            src = np.asarray(src).astype(np.int64)
            tgt = np.asarray(tgt).astype(np.int64)
            keep = src < Q
            src, tgt = src[keep], tgt[keep]
            if src.shape[0] == 0:
                continue
            tcls[b, src, 0] = labels[tgt].astype(np.int32)
            match[b, src, 0] = 1.0
            tbox[b, src, :] = np.asarray(t['boxes'])[tgt].astype(np.float32)
            rows = b * Q + src
            kmask[rows, 0] = 1.0
            if 'keypoints' in t:
                kp = np.asarray(t['keypoints'])[tgt].astype(np.float32)
                zg[rows, :] = kp[:, :2 * K]
                vk[rows, :] = kp[:, 2 * K:3 * K]
            if 'area' in t:
                area = np.maximum(np.asarray(t['area'])[tgt].astype(np.float32), 1e-9)
                invs[rows, :] = 1.0 / (2.0 * area[:, None] * var[None, :])
        return meta, tcls, match, tbox, zg, vk, invs, kmask

    # ---------- forward ------------------------------------------------------
    def forward(self, outputs, targets):
        pred_logits = outputs['pred_logits']
        B, Q, C = pred_logits.shape
        K = self.num_body_points
        has_dn = 'num_tgt' in outputs
        num_tgt = float(outputs['num_tgt']) if has_dn else 1.0

        # matcher + target prep are host-side (NumPy), as in the reference; in a real
        # pipeline targets arrive from the dataloader already on host.
        indices, cost_mean_dict = self.matcher(outputs, targets)
        targets_np = [{k: np.asarray(v) for k, v in t.items()} for t in targets]
        num_boxes = max(float(sum(int(t['labels'].shape[0]) for t in targets_np)), 1.0)
        meta, tcls, match, tbox, zg, vk, invs, kmask = self._prepare_host_inputs(
            targets_np, indices, B, Q, num_boxes, num_tgt)

        # device tensors are passed to the kernel directly (only free bitcast reshapes)
        logits = _as_f32(pred_logits)
        pbox = _as_f32(outputs['pred_boxes'])
        if 'pred_keypoints' in outputs:
            kpt = _as_f32(outputs['pred_keypoints']).reshape(B * Q, 3 * K)
        else:
            kpt = jnp.zeros((B * Q, 3 * K), jnp.float32)

        if has_dn:
            dnlogit = _as_f32(outputs['dn_class_pred'])
            ND = dnlogit.shape[1]
            dnlbl = outputs['dn_class_input'].astype(jnp.int32).reshape(B, ND, 1)
            dnsbox = _as_f32(outputs['dn_bbox_pred'])
            dntbox = _as_f32(outputs['dn_bbox_input'])
        else:
            ND = 1
            dnlogit = jnp.zeros((B, ND, C), jnp.float32)
            dnlbl = jnp.full((B, ND, 1), C, jnp.int32)    # sentinel -> zero one-hot
            dnsbox = jnp.zeros((B, ND, 4), jnp.float32)
            dntbox = jnp.zeros((B, ND, 4), jnp.float32)

        (loss_ce, class_err, card_err, loss_bbox, loss_giou, loss_kpt, loss_oks,
         dn_ce, dn_bbox, dn_giou) = _fused_criterion(
            meta, logits, tcls, match, pbox, tbox, kpt, zg, vk, invs, kmask,
            self._pair, dnlogit, dnlbl, dnsbox, dntbox, alpha=self.focal_alpha)

        if not has_dn:
            z = jnp.zeros((), jnp.float32)
            dn_ce, dn_bbox, dn_giou = z, z, z

        all_losses = {
            'loss_ce': loss_ce, 'class_error': class_err,
            'cardinality_error': card_err,
            'loss_bbox': loss_bbox, 'loss_giou': loss_giou,
            'loss_keypoints': loss_kpt, 'loss_oks': loss_oks,
            'dn_loss_ce': dn_ce, 'dn_loss_bbox': dn_bbox, 'dn_loss_giou': dn_giou,
        }
        key_map = {
            'labels': ['loss_ce', 'class_error'],
            'cardinality': ['cardinality_error'],
            'boxes': ['loss_bbox', 'loss_giou'],
            'keypoints': ['loss_keypoints', 'loss_oks'],
            'dn_label': ['dn_loss_ce'],
            'dn_bbox': ['dn_loss_bbox', 'dn_loss_giou'],
        }
        losses = {}
        for loss in self.losses:
            if loss == 'matching':
                losses.update({f'set_{k}': v for k, v in cost_mean_dict.items()})
            else:
                for k in key_map[loss]:
                    losses[k] = all_losses[k]
        # TODO(synk): 'aux_outputs' / 'interm_outputs' / 'query_expand' branches only run
        #             when those keys exist in `outputs`; not present here.
        return losses


# ---------------------------------------------------------------------------
if __name__ == "__main__":
    B, Q, C, K, ND = 2, NUM_QUERIES, NUM_CLASSES, NUM_BODY_POINTS, NUM_DN
    key = jax.random.PRNGKey(0)
    ks = jax.random.split(key, 12)

    outputs = {
        'pred_logits': jax.random.normal(ks[0], (B, Q, C), jnp.float32),
        'pred_boxes': jax.nn.sigmoid(jax.random.normal(ks[1], (B, Q, 4), jnp.float32)),
        'pred_keypoints': jax.nn.sigmoid(
            jax.random.normal(ks[2], (B, Q, 3 * K), jnp.float32)),
        # DN (denoising) branch, so dn_label / dn_bbox hot paths run in the kernel.
        'dn_class_pred': jax.random.normal(ks[3], (B, ND, C), jnp.float32),
        'dn_class_input': jax.random.randint(ks[4], (B, ND), 0, C, dtype=jnp.int32),
        'dn_bbox_pred': jax.nn.sigmoid(jax.random.normal(ks[5], (B, ND, 4), jnp.float32)),
        'dn_bbox_input': jax.nn.sigmoid(jax.random.normal(ks[6], (B, ND, 4), jnp.float32)),
        'num_tgt': float(B * ND),
    }

    # targets live on host (NumPy), as they would coming out of a dataloader
    targets = []
    for bi, n in enumerate([3, 2]):
        kk = jax.random.split(ks[7 + bi], 5)
        labels = np.asarray(jax.random.randint(kk[0], (n,), 0, C, dtype=jnp.int32))
        boxes = np.asarray(jax.random.uniform(kk[1], (n, 4), jnp.float32,
                                              minval=0.1, maxval=0.5))
        zk = np.asarray(jax.random.uniform(kk[2], (n, 2 * K), jnp.float32))
        vis = np.asarray((jax.random.uniform(kk[3], (n, K)) > 0.3).astype(jnp.float32))
        area = np.asarray(jax.random.uniform(kk[4], (n,), jnp.float32,
                                             minval=0.1, maxval=0.5))
        targets.append({'labels': labels, 'boxes': boxes,
                        'keypoints': np.concatenate([zk, vis], axis=1),
                        'area': area})

    criterion = SetCriterionPallas(
        num_classes=C, matcher=identity_matcher, weight_dict={},
        focal_alpha=FOCAL_ALPHA,
        losses=['labels', 'boxes', 'cardinality', 'keypoints', 'dn_label', 'dn_bbox'],
        num_body_points=K)

    losses = criterion.forward(outputs, targets)
    losses = jax.tree_util.tree_map(jax.block_until_ready, losses)
    assert all(bool(jnp.all(jnp.isfinite(v))) for v in losses.values())
    print("KERNEL_OK")
</pallas_src>

<mosaic_0001>
module attributes {stable_mosaic.version = 11 : i64} {
  func.func @_fused_criterion_kernel(%arg0: memref<2x8xf32, #tpu.memory_space<vmem>>, %arg1: memref<2x16x4xf32, #tpu.memory_space<vmem>>, %arg2: memref<2x16x1xi32, #tpu.memory_space<vmem>>, %arg3: memref<2x16x1xf32, #tpu.memory_space<vmem>>, %arg4: memref<2x16x4xf32, #tpu.memory_space<vmem>>, %arg5: memref<2x16x4xf32, #tpu.memory_space<vmem>>, %arg6: memref<32x51xf32, #tpu.memory_space<vmem>>, %arg7: memref<32x34xf32, #tpu.memory_space<vmem>>, %arg8: memref<32x17xf32, #tpu.memory_space<vmem>>, %arg9: memref<32x17xf32, #tpu.memory_space<vmem>>, %arg10: memref<32x1xf32, #tpu.memory_space<vmem>>, %arg11: memref<34x17xf32, #tpu.memory_space<vmem>>, %arg12: memref<2x16x4xf32, #tpu.memory_space<vmem>>, %arg13: memref<2x16x1xi32, #tpu.memory_space<vmem>>, %arg14: memref<2x16x4xf32, #tpu.memory_space<vmem>>, %arg15: memref<2x16x4xf32, #tpu.memory_space<vmem>>, %arg16: memref<1x128xf32, #tpu.memory_space<vmem>>) attributes {dimension_semantics = [], scalar_prefetch = 0 : i64, scratch_operands = 0 : i64, tpu.core_type = #tpu.core_type<tc>} {
    %c0 = arith.constant 0 : index
    %c0_0 = arith.constant 0 : index
    %0 = vector.load %arg0[%c0, %c0_0] : memref<2x8xf32, #tpu.memory_space<vmem>>, vector<2x8xf32>
    %1 = vector.extract_strided_slice %0 {offsets = [0, 1], sizes = [1, 1], strides = [1, 1]} : vector<2x8xf32> to vector<1x1xf32>
    %cst = arith.constant 1.000000e+00 : f32
    %2 = vector.broadcast %cst : f32 to vector<1x1xf32>
    %3 = arith.divf %2, %1 : vector<1x1xf32>
    %4 = vector.extract_strided_slice %0 {offsets = [0, 2], sizes = [1, 1], strides = [1, 1]} : vector<2x8xf32> to vector<1x1xf32>
    %cst_1 = arith.constant 1.000000e+00 : f32
    %5 = vector.broadcast %cst_1 : f32 to vector<1x1xf32>
    %6 = arith.divf %5, %4 : vector<1x1xf32>
    %c0_2 = arith.constant 0 : index
    %c0_3 = arith.constant 0 : index
    %c0_4 = arith.constant 0 : index
    %7 = vector.load %arg1[%c0_2, %c0_3, %c0_4] : memref<2x16x4xf32, #tpu.memory_space<vmem>>, vector<2x16x4xf32>
    %8 = tpu.iota {dimensions = array<i32: 2>} : vector<2x16x4xi32>
    %c0_5 = arith.constant 0 : index
    %c0_6 = arith.constant 0 : index
    %c0_7 = arith.constant 0 : index
    %9 = vector.load %arg2[%c0_5, %c0_6, %c0_7] : memref<2x16x1xi32, #tpu.memory_space<vmem>>, vector<2x16x1xi32>
    %10 = vector.broadcast %9 : vector<2x16x1xi32> to vector<2x16x4xi32>
    %11 = arith.cmpi eq, %8, %10 : vector<2x16x4xi32>
    %12 = arith.extui %11 : vector<2x16x4xi1> to vector<2x16x4xi32>
    %13 = arith.sitofp %12 : vector<2x16x4xi32> to vector<2x16x4xf32>
    %c0_8 = arith.constant 0 : index
    %c0_9 = arith.constant 0 : index
    %c0_10 = arith.constant 0 : index
    %14 = vector.load %arg3[%c0_8, %c0_9, %c0_10] : memref<2x16x1xf32, #tpu.memory_space<vmem>>, vector<2x16x1xf32>
    %15 = math.absf %7 : vector<2x16x4xf32>
    %cst_11 = arith.constant 0.000000e+00 : f32
    %16 = vector.broadcast %cst_11 : f32 to vector<2x16x4xf32>
    %17 = arith.subf %16, %15 : vector<2x16x4xf32>
    %18 = math.exp %17 : vector<2x16x4xf32>
    %cst_12 = arith.constant 1.000000e+00 : f32
    %19 = vector.broadcast %cst_12 : f32 to vector<2x16x4xf32>
    %20 = arith.addf %19, %18 : vector<2x16x4xf32>
    %cst_13 = arith.constant 1.000000e+00 : f32
    %21 = vector.broadcast %cst_13 : f32 to vector<2x16x4xf32>
    %22 = arith.divf %21, %20 : vector<2x16x4xf32>
    %cst_14 = arith.constant 0.000000e+00 : f32
    %23 = vector.broadcast %cst_14 : f32 to vector<2x16x4xf32>
    %24 = arith.cmpf oge, %7, %23 : vector<2x16x4xf32>
    %25 = arith.mulf %18, %22 : vector<2x16x4xf32>
    %26 = arith.select %24, %22, %25 : vector<2x16x4xi1>, vector<2x16x4xf32>
    %cst_15 = arith.constant 0.000000e+00 : f32
    %27 = vector.broadcast %cst_15 : f32 to vector<2x16x4xf32>
    %28 = arith.maximumf %7, %27 : vector<2x16x4xf32>
    %29 = arith.mulf %7, %13 : vector<2x16x4xf32>
    %30 = arith.subf %28, %29 : vector<2x16x4xf32>
    %31 = math.log %20 : vector<2x16x4xf32>
    %32 = arith.addf %30, %31 : vector<2x16x4xf32>
    %33 = arith.mulf %26, %13 : vector<2x16x4xf32>
    %cst_16 = arith.constant 1.000000e+00 : f32
    %34 = vector.broadcast %cst_16 : f32 to vector<2x16x4xf32>
    %35 = arith.subf %34, %26 : vector<2x16x4xf32>
    %cst_17 = arith.constant 1.000000e+00 : f32
    %36 = vector.broadcast %cst_17 : f32 to vector<2x16x4xf32>
    %37 = arith.subf %36, %13 : vector<2x16x4xf32>
    %38 = arith.mulf %35, %37 : vector<2x16x4xf32>
    %39 = arith.addf %33, %38 : vector<2x16x4xf32>
    %cst_18 = arith.constant 1.000000e+00 : f32
    %40 = vector.broadcast %cst_18 : f32 to vector<2x16x4xf32>
    %41 = arith.subf %40, %39 : vector<2x16x4xf32>
    %cst_19 = arith.constant 2.500000e-01 : f32
    %42 = vector.broadcast %cst_19 : f32 to vector<2x16x4xf32>
    %43 = arith.mulf %42, %13 : vector<2x16x4xf32>
    %cst_20 = arith.constant 1.000000e+00 : f32
    %44 = vector.broadcast %cst_20 : f32 to vector<2x16x4xf32>
    %45 = arith.subf %44, %13 : vector<2x16x4xf32>
    %cst_21 = arith.constant 7.500000e-01 : f32
    %46 = vector.broadcast %cst_21 : f32 to vector<2x16x4xf32>
    %47 = arith.mulf %46, %45 : vector<2x16x4xf32>
    %48 = arith.addf %43, %47 : vector<2x16x4xf32>
    %49 = arith.mulf %48, %32 : vector<2x16x4xf32>
    %50 = arith.mulf %49, %41 : vector<2x16x4xf32>
    %51 = arith.mulf %50, %41 : vector<2x16x4xf32>
    %52 = vector.shape_cast %51 : vector<2x16x4xf32> to vector<1x2x16x4xf32>
    %cst_22 = arith.constant dense<0.000000e+00> : vector<1xf32>
    %53 = vector.multi_reduction <add>, %52, %cst_22 [1, 2, 3] : vector<1x2x16x4xf32> to vector<1xf32>
    %54 = vector.shape_cast %53 : vector<1xf32> to vector<1x1x1x1xf32>
    %55 = vector.extract %54[0, 0, 0, 0] : f32 from vector<1x1x1x1xf32>
    %56 = vector.broadcast %55 : f32 to vector<1x1xf32>
    %57 = arith.mulf %56, %3 : vector<1x1xf32>
    %58 = arith.mulf %7, %13 : vector<2x16x4xf32>
    %cst_23 = arith.constant dense<0.000000e+00> : vector<2x16xf32>
    %59 = vector.multi_reduction <add>, %58, %cst_23 [2] : vector<2x16x4xf32> to vector<2x16xf32>
    %60 = vector.shape_cast %59 : vector<2x16xf32> to vector<2x16x1xf32>
    %cst_24 = arith.constant dense<0xFF800000> : vector<2x16xf32>
    %61 = vector.multi_reduction <maximumf>, %7, %cst_24 [2] : vector<2x16x4xf32> to vector<2x16xf32>
    %62 = vector.shape_cast %61 : vector<2x16xf32> to vector<2x16x1xf32>
    %63 = arith.cmpf oge, %60, %62 : vector<2x16x1xf32>
    %64 = arith.extui %63 : vector<2x16x1xi1> to vector<2x16x1xi32>
    %65 = arith.sitofp %64 : vector<2x16x1xi32> to vector<2x16x1xf32>
    %66 = vector.shape_cast %14 : vector<2x16x1xf32> to vector<1x2x16x1xf32>
    %cst_25 = arith.constant dense<0.000000e+00> : vector<1xf32>
    %67 = vector.multi_reduction <add>, %66, %cst_25 [1, 2, 3] : vector<1x2x16x1xf32> to vector<1xf32>
    %68 = vector.shape_cast %67 : vector<1xf32> to vector<1x1x1x1xf32>
    %69 = vector.extract %68[0, 0, 0, 0] : f32 from vector<1x1x1x1xf32>
    %cst_26 = arith.constant 1.000000e+00 : f32
    %70 = arith.maximumf %69, %cst_26 : f32
    %71 = arith.mulf %65, %14 : vector<2x16x1xf32>
    %72 = vector.shape_cast %71 : vector<2x16x1xf32> to vector<1x2x16x1xf32>
    %cst_27 = arith.constant dense<0.000000e+00> : vector<1xf32>
    %73 = vector.multi_reduction <add>, %72, %cst_27 [1, 2, 3] : vector<1x2x16x1xf32> to vector<1xf32>
    %74 = vector.shape_cast %73 : vector<1xf32> to vector<1x1x1x1xf32>
    %75 = vector.extract %74[0, 0, 0, 0] : f32 from vector<1x1x1x1xf32>
    %76 = arith.divf %75, %70 : f32
    %cst_28 = arith.constant 1.000000e+00 : f32
    %77 = arith.subf %cst_28, %76 : f32
    %cst_29 = arith.constant 1.000000e+02 : f32
    %78 = arith.mulf %cst_29, %77 : f32
    %c3_i32 = arith.constant 3 : i32
    %79 = vector.broadcast %c3_i32 : i32 to vector<2x16x4xi32>
    %80 = arith.cmpi slt, %8, %79 : vector<2x16x4xi32>
    %cst_30 = arith.constant -1.000000e+30 : f32
    %81 = vector.broadcast %cst_30 : f32 to vector<2x16x4xf32>
    %82 = arith.select %80, %7, %81 : vector<2x16x4xi1>, vector<2x16x4xf32>
    %cst_31 = arith.constant dense<0xFF800000> : vector<2x16xf32>
    %83 = vector.multi_reduction <maximumf>, %82, %cst_31 [2] : vector<2x16x4xf32> to vector<2x16xf32>
    %84 = vector.shape_cast %83 : vector<2x16xf32> to vector<2x16x1xf32>
    %85 = vector.extract_strided_slice %7 {offsets = [0, 0, 3], sizes = [2, 16, 1], strides = [1, 1, 1]} : vector<2x16x4xf32> to vector<2x16x1xf32>
    %86 = arith.cmpf oge, %84, %85 : vector<2x16x1xf32>
    %87 = arith.extui %86 : vector<2x16x1xi1> to vector<2x16x1xi32>
    %88 = arith.sitofp %87 : vector<2x16x1xi32> to vector<2x16x1xf32>
    %cst_32 = arith.constant 0.000000e+00 : f32
    %89 = vector.broadcast %cst_32 : f32 to vector<1x1xf32>
    %90 = vector.extract_strided_slice %88 {offsets = [0, 0, 0], sizes = [1, 16, 1], strides = [1, 1, 1]} : vector<2x16x1xf32> to vector<1x16x1xf32>
    %91 = vector.shape_cast %90 : vector<1x16x1xf32> to vector<1x1x16x1xf32>
    %cst_33 = arith.constant dense<0.000000e+00> : vector<1xf32>
    %92 = vector.multi_reduction <add>, %91, %cst_33 [1, 2, 3] : vector<1x1x16x1xf32> to vector<1xf32>
    %93 = vector.shape_cast %92 : vector<1xf32> to vector<1x1x1x1xf32>
    %94 = vector.extract %93[0, 0, 0, 0] : f32 from vector<1x1x1x1xf32>
    %95 = vector.extract_strided_slice %0 {offsets = [0, 0], sizes = [1, 1], strides = [1, 1]} : vector<2x8xf32> to vector<1x1xf32>
    %96 = vector.broadcast %94 : f32 to vector<1x1xf32>
    %97 = arith.subf %96, %95 : vector<1x1xf32>
    %98 = math.absf %97 : vector<1x1xf32>
    %99 = arith.addf %89, %98 : vector<1x1xf32>
    %100 = vector.extract_strided_slice %88 {offsets = [1, 0, 0], sizes = [1, 16, 1], strides = [1, 1, 1]} : vector<2x16x1xf32> to vector<1x16x1xf32>
    %101 = vector.shape_cast %100 : vector<1x16x1xf32> to vector<1x1x16x1xf32>
    %cst_34 = arith.constant dense<0.000000e+00> : vector<1xf32>
    %102 = vector.multi_reduction <add>, %101, %cst_34 [1, 2, 3] : vector<1x1x16x1xf32> to vector<1xf32>
    %103 = vector.shape_cast %102 : vector<1xf32> to vector<1x1x1x1xf32>
    %104 = vector.extract %103[0, 0, 0, 0] : f32 from vector<1x1x1x1xf32>
    %105 = vector.extract_strided_slice %0 {offsets = [1, 0], sizes = [1, 1], strides = [1, 1]} : vector<2x8xf32> to vector<1x1xf32>
    %106 = vector.broadcast %104 : f32 to vector<1x1xf32>
    %107 = arith.subf %106, %105 : vector<1x1xf32>
    %108 = math.absf %107 : vector<1x1xf32>
    %109 = arith.addf %99, %108 : vector<1x1xf32>
    %cst_35 = arith.constant 5.000000e-01 : f32
    %110 = vector.broadcast %cst_35 : f32 to vector<1x1xf32>
    %111 = arith.mulf %109, %110 : vector<1x1xf32>
    %c0_36 = arith.constant 0 : index
    %c0_37 = arith.constant 0 : index
    %c0_38 = arith.constant 0 : index
    %112 = vector.load %arg4[%c0_36, %c0_37, %c0_38] : memref<2x16x4xf32, #tpu.memory_space<vmem>>, vector<2x16x4xf32>
    %c0_39 = arith.constant 0 : index
    %c0_40 = arith.constant 0 : index
    %c0_41 = arith.constant 0 : index
    %113 = vector.load %arg5[%c0_39, %c0_40, %c0_41] : memref<2x16x4xf32, #tpu.memory_space<vmem>>, vector<2x16x4xf32>
    %114 = arith.subf %112, %113 : vector<2x16x4xf32>
    %115 = math.absf %114 : vector<2x16x4xf32>
    %cst_42 = arith.constant dense<0.000000e+00> : vector<2x16xf32>
    %116 = vector.multi_reduction <add>, %115, %cst_42 [2] : vector<2x16x4xf32> to vector<2x16xf32>
    %117 = vector.shape_cast %116 : vector<2x16xf32> to vector<2x16x1xf32>
    %118 = vector.extract_strided_slice %112 {offsets = [0, 0, 0], sizes = [2, 16, 1], strides = [1, 1, 1]} : vector<2x16x4xf32> to vector<2x16x1xf32>
    %119 = vector.extract_strided_slice %112 {offsets = [0, 0, 1], sizes = [2, 16, 1], strides = [1, 1, 1]} : vector<2x16x4xf32> to vector<2x16x1xf32>
    %120 = vector.extract_strided_slice %112 {offsets = [0, 0, 2], sizes = [2, 16, 1], strides = [1, 1, 1]} : vector<2x16x4xf32> to vector<2x16x1xf32>
    %121 = vector.extract_strided_slice %112 {offsets = [0, 0, 3], sizes = [2, 16, 1], strides = [1, 1, 1]} : vector<2x16x4xf32> to vector<2x16x1xf32>
    %122 = vector.extract_strided_slice %113 {offsets = [0, 0, 0], sizes = [2, 16, 1], strides = [1, 1, 1]} : vector<2x16x4xf32> to vector<2x16x1xf32>
    %123 = vector.extract_strided_slice %113 {offsets = [0, 0, 1], sizes = [2, 16, 1], strides = [1, 1, 1]} : vector<2x16x4xf32> to vector<2x16x1xf32>
    %124 = vector.extract_strided_slice %113 {offsets = [0, 0, 2], sizes = [2, 16, 1], strides = [1, 1, 1]} : vector<2x16x4xf32> to vector<2x16x1xf32>
    %125 = vector.extract_strided_slice %113 {offsets = [0, 0, 3], sizes = [2, 16, 1], strides = [1, 1, 1]} : vector<2x16x4xf32> to vector<2x16x1xf32>
    %cst_43 = arith.constant 5.000000e-01 : f32
    %126 = vector.broadcast %cst_43 : f32 to vector<2x16x1xf32>
    %127 = arith.mulf %126, %120 : vector<2x16x1xf32>
    %128 = arith.subf %118, %127 : vector<2x16x1xf32>
    %cst_44 = arith.constant 5.000000e-01 : f32
    %129 = vector.broadcast %cst_44 : f32 to vector<2x16x1xf32>
    %130 = arith.mulf %129, %121 : vector<2x16x1xf32>
    %131 = arith.subf %119, %130 : vector<2x16x1xf32>
    %cst_45 = arith.constant 5.000000e-01 : f32
    %132 = vector.broadcast %cst_45 : f32 to vector<2x16x1xf32>
    %133 = arith.mulf %132, %120 : vector<2x16x1xf32>
    %134 = arith.addf %118, %133 : vector<2x16x1xf32>
    %cst_46 = arith.constant 5.000000e-01 : f32
    %135 = vector.broadcast %cst_46 : f32 to vector<2x16x1xf32>
    %136 = arith.mulf %135, %121 : vector<2x16x1xf32>
    %137 = arith.addf %119, %136 : vector<2x16x1xf32>
    %cst_47 = arith.constant 5.000000e-01 : f32
    %138 = vector.broadcast %cst_47 : f32 to vector<2x16x1xf32>
    %139 = arith.mulf %138, %124 : vector<2x16x1xf32>
    %140 = arith.subf %122, %139 : vector<2x16x1xf32>
    %cst_48 = arith.constant 5.000000e-01 : f32
    %141 = vector.broadcast %cst_48 : f32 to vector<2x16x1xf32>
    %142 = arith.mulf %141, %125 : vector<2x16x1xf32>
    %143 = arith.subf %123, %142 : vector<2x16x1xf32>
    %cst_49 = arith.constant 5.000000e-01 : f32
    %144 = vector.broadcast %cst_49 : f32 to vector<2x16x1xf32>
    %145 = arith.mulf %144, %124 : vector<2x16x1xf32>
    %146 = arith.addf %122, %145 : vector<2x16x1xf32>
    %cst_50 = arith.constant 5.000000e-01 : f32
    %147 = vector.broadcast %cst_50 : f32 to vector<2x16x1xf32>
    %148 = arith.mulf %147, %125 : vector<2x16x1xf32>
    %149 = arith.addf %123, %148 : vector<2x16x1xf32>
    %150 = arith.subf %134, %128 : vector<2x16x1xf32>
    %151 = arith.subf %137, %131 : vector<2x16x1xf32>
    %152 = arith.mulf %150, %151 : vector<2x16x1xf32>
    %153 = arith.subf %146, %140 : vector<2x16x1xf32>
    %154 = arith.subf %149, %143 : vector<2x16x1xf32>
    %155 = arith.mulf %153, %154 : vector<2x16x1xf32>
    %156 = arith.minimumf %134, %146 : vector<2x16x1xf32>
    %157 = arith.maximumf %128, %140 : vector<2x16x1xf32>
    %158 = arith.subf %156, %157 : vector<2x16x1xf32>
    %cst_51 = arith.constant 0.000000e+00 : f32
    %159 = vector.broadcast %cst_51 : f32 to vector<2x16x1xf32>
    %160 = arith.maximumf %158, %159 : vector<2x16x1xf32>
    %161 = arith.minimumf %137, %149 : vector<2x16x1xf32>
    %162 = arith.maximumf %131, %143 : vector<2x16x1xf32>
    %163 = arith.subf %161, %162 : vector<2x16x1xf32>
    %cst_52 = arith.constant 0.000000e+00 : f32
    %164 = vector.broadcast %cst_52 : f32 to vector<2x16x1xf32>
    %165 = arith.maximumf %163, %164 : vector<2x16x1xf32>
    %166 = arith.mulf %160, %165 : vector<2x16x1xf32>
    %167 = arith.addf %152, %155 : vector<2x16x1xf32>
    %168 = arith.subf %167, %166 : vector<2x16x1xf32>
    %cst_53 = arith.constant 1.000000e-07 : f32
    %169 = vector.broadcast %cst_53 : f32 to vector<2x16x1xf32>
    %170 = arith.addf %168, %169 : vector<2x16x1xf32>
    %171 = tpu.reciprocal %170 {approx = true} : vector<2x16x1xf32> -> vector<2x16x1xf32>
    %172 = arith.mulf %166, %171 : vector<2x16x1xf32>
    %173 = arith.maximumf %134, %146 : vector<2x16x1xf32>
    %174 = arith.minimumf %128, %140 : vector<2x16x1xf32>
    %175 = arith.subf %173, %174 : vector<2x16x1xf32>
    %176 = arith.maximumf %137, %149 : vector<2x16x1xf32>
    %177 = arith.minimumf %131, %143 : vector<2x16x1xf32>
    %178 = arith.subf %176, %177 : vector<2x16x1xf32>
    %179 = arith.mulf %175, %178 : vector<2x16x1xf32>
    %180 = arith.subf %179, %168 : vector<2x16x1xf32>
    %cst_54 = arith.constant 1.000000e-07 : f32
    %181 = vector.broadcast %cst_54 : f32 to vector<2x16x1xf32>
    %182 = arith.addf %179, %181 : vector<2x16x1xf32>
    %183 = tpu.reciprocal %182 {approx = true} : vector<2x16x1xf32> -> vector<2x16x1xf32>
    %184 = arith.mulf %180, %183 : vector<2x16x1xf32>
    %185 = arith.subf %172, %184 : vector<2x16x1xf32>
    %186 = arith.mulf %117, %14 : vector<2x16x1xf32>
    %187 = vector.shape_cast %186 : vector<2x16x1xf32> to vector<1x2x16x1xf32>
    %cst_55 = arith.constant dense<0.000000e+00> : vector<1xf32>
    %188 = vector.multi_reduction <add>, %187, %cst_55 [1, 2, 3] : vector<1x2x16x1xf32> to vector<1xf32>
    %189 = vector.shape_cast %188 : vector<1xf32> to vector<1x1x1x1xf32>
    %190 = vector.extract %189[0, 0, 0, 0] : f32 from vector<1x1x1x1xf32>
    %cst_56 = arith.constant 1.000000e+00 : f32
    %191 = vector.broadcast %cst_56 : f32 to vector<2x16x1xf32>
    %192 = arith.subf %191, %185 : vector<2x16x1xf32>
    %193 = arith.mulf %192, %14 : vector<2x16x1xf32>
    %194 = vector.shape_cast %193 : vector<2x16x1xf32> to vector<1x2x16x1xf32>
    %cst_57 = arith.constant dense<0.000000e+00> : vector<1xf32>
    %195 = vector.multi_reduction <add>, %194, %cst_57 [1, 2, 3] : vector<1x2x16x1xf32> to vector<1xf32>
    %196 = vector.shape_cast %195 : vector<1xf32> to vector<1x1x1x1xf32>
    %197 = vector.extract %196[0, 0, 0, 0] : f32 from vector<1x1x1x1xf32>
    %198 = vector.broadcast %190 : f32 to vector<1x1xf32>
    %199 = arith.mulf %198, %3 : vector<1x1xf32>
    %200 = vector.broadcast %197 : f32 to vector<1x1xf32>
    %201 = arith.mulf %200, %3 : vector<1x1xf32>
    %c0_58 = arith.constant 0 : index
    %c0_59 = arith.constant 0 : index
    %202 = vector.load %arg6[%c0_58, %c0_59] : memref<32x51xf32, #tpu.memory_space<vmem>>, vector<32x34xf32>
    %c0_60 = arith.constant 0 : index
    %c0_61 = arith.constant 0 : index
    %203 = vector.load %arg7[%c0_60, %c0_61] : memref<32x34xf32, #tpu.memory_space<vmem>>, vector<32x34xf32>
    %204 = arith.subf %202, %203 : vector<32x34xf32>
    %c0_62 = arith.constant 0 : index
    %c0_63 = arith.constant 0 : index
    %205 = vector.load %arg11[%c0_62, %c0_63] : memref<34x17xf32, #tpu.memory_space<vmem>>, vector<34x17xf32>
    %206 = math.absf %204 : vector<32x34xf32>
    %cst_64 = arith.constant dense<0.000000e+00> : vector<32x17xf32>
    %207 = tpu.matmul %206, %205, %cst_64 {dimension_numbers = #tpu.dot_dimension_numbers<[1], [0], [0], [1], [0, 0, 1, 1], [], []>} : vector<32x34xf32>, vector<34x17xf32>, vector<32x17xf32> -> vector<32x17xf32>
    %208 = arith.mulf %204, %204 : vector<32x34xf32>
    %cst_65 = arith.constant dense<0.000000e+00> : vector<32x17xf32>
    %209 = tpu.matmul %208, %205, %cst_65 {dimension_numbers = #tpu.dot_dimension_numbers<[1], [0], [0], [1], [0, 0, 1, 1], [], []>} : vector<32x34xf32>, vector<34x17xf32>, vector<32x17xf32> -> vector<32x17xf32>
    %c0_66 = arith.constant 0 : index
    %c0_67 = arith.constant 0 : index
    %210 = vector.load %arg8[%c0_66, %c0_67] : memref<32x17xf32, #tpu.memory_space<vmem>>, vector<32x17xf32>
    %c0_68 = arith.constant 0 : index
    %c0_69 = arith.constant 0 : index
    %211 = vector.load %arg10[%c0_68, %c0_69] : memref<32x1xf32, #tpu.memory_space<vmem>>, vector<32x1xf32>
    %212 = arith.mulf %207, %210 : vector<32x17xf32>
    %213 = vector.shape_cast %212 : vector<32x17xf32> to vector<1x32x17xf32>
    %cst_70 = arith.constant dense<0.000000e+00> : vector<1xf32>
    %214 = vector.multi_reduction <add>, %213, %cst_70 [1, 2] : vector<1x32x17xf32> to vector<1xf32>
    %215 = vector.shape_cast %214 : vector<1xf32> to vector<1x1x1xf32>
    %216 = vector.extract %215[0, 0, 0] : f32 from vector<1x1x1xf32>
    %217 = vector.shape_cast %210 : vector<32x17xf32> to vector<1x32x17xf32>
    %cst_71 = arith.constant dense<0.000000e+00> : vector<1xf32>
    %218 = vector.multi_reduction <add>, %217, %cst_71 [1, 2] : vector<1x32x17xf32> to vector<1xf32>
    %219 = vector.shape_cast %218 : vector<1xf32> to vector<1x1x1xf32>
    %220 = vector.extract %219[0, 0, 0] : f32 from vector<1x1x1xf32>
    %cst_72 = arith.constant 2.000000e+00 : f32
    %221 = arith.mulf %220, %cst_72 : f32
    %cst_73 = arith.constant 1.000000e+00 : f32
    %222 = arith.maximumf %221, %cst_73 : f32
    %cst_74 = arith.constant 0.000000e+00 : f32
    %223 = vector.broadcast %cst_74 : f32 to vector<32x17xf32>
    %224 = arith.subf %223, %209 : vector<32x17xf32>
    %c0_75 = arith.constant 0 : index
    %c0_76 = arith.constant 0 : index
    %225 = vector.load %arg9[%c0_75, %c0_76] : memref<32x17xf32, #tpu.memory_space<vmem>>, vector<32x17xf32>
    %226 = arith.mulf %224, %225 : vector<32x17xf32>
    %227 = math.exp %226 : vector<32x17xf32>
    %228 = arith.mulf %227, %210 : vector<32x17xf32>
    %cst_77 = arith.constant dense<0.000000e+00> : vector<32xf32>
    %229 = vector.multi_reduction <add>, %210, %cst_77 [1] : vector<32x17xf32> to vector<32xf32>
    %230 = vector.shape_cast %229 : vector<32xf32> to vector<32x1xf32>
    %cst_78 = arith.constant dense<0.000000e+00> : vector<32xf32>
    %231 = vector.multi_reduction <add>, %228, %cst_78 [1] : vector<32x17xf32> to vector<32xf32>
    %232 = vector.shape_cast %231 : vector<32xf32> to vector<32x1xf32>
    %cst_79 = arith.constant 9.99999997E-7 : f32
    %233 = vector.broadcast %cst_79 : f32 to vector<32x1xf32>
    %234 = arith.addf %230, %233 : vector<32x1xf32>
    %235 = tpu.reciprocal %234 {approx = true} : vector<32x1xf32> -> vector<32x1xf32>
    %236 = arith.mulf %232, %235 : vector<32x1xf32>
    %cst_80 = arith.constant 9.99999997E-7 : f32
    %237 = vector.broadcast %cst_80 : f32 to vector<32x1xf32>
    %238 = arith.maximumf %236, %237 : vector<32x1xf32>
    %239 = vector.shape_cast %211 : vector<32x1xf32> to vector<1x32x1xf32>
    %cst_81 = arith.constant dense<0.000000e+00> : vector<1xf32>
    %240 = vector.multi_reduction <add>, %239, %cst_81 [1, 2] : vector<1x32x1xf32> to vector<1xf32>
    %241 = vector.shape_cast %240 : vector<1xf32> to vector<1x1x1xf32>
    %242 = vector.extract %241[0, 0, 0] : f32 from vector<1x1x1xf32>
    %cst_82 = arith.constant 1.000000e+00 : f32
    %243 = arith.maximumf %242, %cst_82 : f32
    %244 = arith.divf %216, %222 : f32
    %cst_83 = arith.constant 1.000000e+00 : f32
    %245 = vector.broadcast %cst_83 : f32 to vector<32x1xf32>
    %246 = arith.subf %245, %238 : vector<32x1xf32>
    %247 = arith.mulf %246, %211 : vector<32x1xf32>
    %248 = vector.shape_cast %247 : vector<32x1xf32> to vector<1x32x1xf32>
    %cst_84 = arith.constant dense<0.000000e+00> : vector<1xf32>
    %249 = vector.multi_reduction <add>, %248, %cst_84 [1, 2] : vector<1x32x1xf32> to vector<1xf32>
    %250 = vector.shape_cast %249 : vector<1xf32> to vector<1x1x1xf32>
    %251 = vector.extract %250[0, 0, 0] : f32 from vector<1x1x1xf32>
    %252 = arith.divf %251, %243 : f32
    %253 = arith.divf %252, %222 : f32
    %c0_85 = arith.constant 0 : index
    %c0_86 = arith.constant 0 : index
    %c0_87 = arith.constant 0 : index
    %254 = vector.load %arg12[%c0_85, %c0_86, %c0_87] : memref<2x16x4xf32, #tpu.memory_space<vmem>>, vector<2x16x4xf32>
    %255 = tpu.iota {dimensions = array<i32: 2>} : vector<2x16x4xi32>
    %c0_88 = arith.constant 0 : index
    %c0_89 = arith.constant 0 : index
    %c0_90 = arith.constant 0 : index
    %256 = vector.load %arg13[%c0_88, %c0_89, %c0_90] : memref<2x16x1xi32, #tpu.memory_space<vmem>>, vector<2x16x1xi32>
    %257 = vector.broadcast %256 : vector<2x16x1xi32> to vector<2x16x4xi32>
    %258 = arith.cmpi eq, %255, %257 : vector<2x16x4xi32>
    %259 = arith.extui %258 : vector<2x16x4xi1> to vector<2x16x4xi32>
    %260 = arith.sitofp %259 : vector<2x16x4xi32> to vector<2x16x4xf32>
    %261 = math.absf %254 : vector<2x16x4xf32>
    %cst_91 = arith.constant 0.000000e+00 : f32
    %262 = vector.broadcast %cst_91 : f32 to vector<2x16x4xf32>
    %263 = arith.subf %262, %261 : vector<2x16x4xf32>
    %264 = math.exp %263 : vector<2x16x4xf32>
    %cst_92 = arith.constant 1.000000e+00 : f32
    %265 = vector.broadcast %cst_92 : f32 to vector<2x16x4xf32>
    %266 = arith.addf %265, %264 : vector<2x16x4xf32>
    %cst_93 = arith.constant 1.000000e+00 : f32
    %267 = vector.broadcast %cst_93 : f32 to vector<2x16x4xf32>
    %268 = arith.divf %267, %266 : vector<2x16x4xf32>
    %cst_94 = arith.constant 0.000000e+00 : f32
    %269 = vector.broadcast %cst_94 : f32 to vector<2x16x4xf32>
    %270 = arith.cmpf oge, %254, %269 : vector<2x16x4xf32>
    %271 = arith.mulf %264, %268 : vector<2x16x4xf32>
    %272 = arith.select %270, %268, %271 : vector<2x16x4xi1>, vector<2x16x4xf32>
    %cst_95 = arith.constant 0.000000e+00 : f32
    %273 = vector.broadcast %cst_95 : f32 to vector<2x16x4xf32>
    %274 = arith.maximumf %254, %273 : vector<2x16x4xf32>
    %275 = arith.mulf %254, %260 : vector<2x16x4xf32>
    %276 = arith.subf %274, %275 : vector<2x16x4xf32>
    %277 = math.log %266 : vector<2x16x4xf32>
    %278 = arith.addf %276, %277 : vector<2x16x4xf32>
    %279 = arith.mulf %272, %260 : vector<2x16x4xf32>
    %cst_96 = arith.constant 1.000000e+00 : f32
    %280 = vector.broadcast %cst_96 : f32 to vector<2x16x4xf32>
    %281 = arith.subf %280, %272 : vector<2x16x4xf32>
    %cst_97 = arith.constant 1.000000e+00 : f32
    %282 = vector.broadcast %cst_97 : f32 to vector<2x16x4xf32>
    %283 = arith.subf %282, %260 : vector<2x16x4xf32>
    %284 = arith.mulf %281, %283 : vector<2x16x4xf32>
    %285 = arith.addf %279, %284 : vector<2x16x4xf32>
    %cst_98 = arith.constant 1.000000e+00 : f32
    %286 = vector.broadcast %cst_98 : f32 to vector<2x16x4xf32>
    %287 = arith.subf %286, %285 : vector<2x16x4xf32>
    %cst_99 = arith.constant 2.500000e-01 : f32
    %288 = vector.broadcast %cst_99 : f32 to vector<2x16x4xf32>
    %289 = arith.mulf %288, %260 : vector<2x16x4xf32>
    %cst_100 = arith.constant 1.000000e+00 : f32
    %290 = vector.broadcast %cst_100 : f32 to vector<2x16x4xf32>
    %291 = arith.subf %290, %260 : vector<2x16x4xf32>
    %cst_101 = arith.constant 7.500000e-01 : f32
    %292 = vector.broadcast %cst_101 : f32 to vector<2x16x4xf32>
    %293 = arith.mulf %292, %291 : vector<2x16x4xf32>
    %294 = arith.addf %289, %293 : vector<2x16x4xf32>
    %295 = arith.mulf %294, %278 : vector<2x16x4xf32>
    %296 = arith.mulf %295, %287 : vector<2x16x4xf32>
    %297 = arith.mulf %296, %287 : vector<2x16x4xf32>
    %298 = vector.shape_cast %297 : vector<2x16x4xf32> to vector<1x2x16x4xf32>
    %cst_102 = arith.constant dense<0.000000e+00> : vector<1xf32>
    %299 = vector.multi_reduction <add>, %298, %cst_102 [1, 2, 3] : vector<1x2x16x4xf32> to vector<1xf32>
    %300 = vector.shape_cast %299 : vector<1xf32> to vector<1x1x1x1xf32>
    %301 = vector.extract %300[0, 0, 0, 0] : f32 from vector<1x1x1x1xf32>
    %302 = vector.broadcast %301 : f32 to vector<1x1xf32>
    %303 = arith.mulf %302, %6 : vector<1x1xf32>
    %c0_103 = arith.constant 0 : index
    %c0_104 = arith.constant 0 : index
    %c0_105 = arith.constant 0 : index
    %304 = vector.load %arg14[%c0_103, %c0_104, %c0_105] : memref<2x16x4xf32, #tpu.memory_space<vmem>>, vector<2x16x4xf32>
    %c0_106 = arith.constant 0 : index
    %c0_107 = arith.constant 0 : index
    %c0_108 = arith.constant 0 : index
    %305 = vector.load %arg15[%c0_106, %c0_107, %c0_108] : memref<2x16x4xf32, #tpu.memory_space<vmem>>, vector<2x16x4xf32>
    %cst_109 = arith.constant 1.000000e+00 : f32
    %306 = vector.broadcast %cst_109 : f32 to vector<2x16x1xf32>
    %307 = arith.subf %304, %305 : vector<2x16x4xf32>
    %308 = math.absf %307 : vector<2x16x4xf32>
    %cst_110 = arith.constant dense<0.000000e+00> : vector<2x16xf32>
    %309 = vector.multi_reduction <add>, %308, %cst_110 [2] : vector<2x16x4xf32> to vector<2x16xf32>
    %310 = vector.shape_cast %309 : vector<2x16xf32> to vector<2x16x1xf32>
    %311 = vector.extract_strided_slice %304 {offsets = [0, 0, 0], sizes = [2, 16, 1], strides = [1, 1, 1]} : vector<2x16x4xf32> to vector<2x16x1xf32>
    %312 = vector.extract_strided_slice %304 {offsets = [0, 0, 1], sizes = [2, 16, 1], strides = [1, 1, 1]} : vector<2x16x4xf32> to vector<2x16x1xf32>
    %313 = vector.extract_strided_slice %304 {offsets = [0, 0, 2], sizes = [2, 16, 1], strides = [1, 1, 1]} : vector<2x16x4xf32> to vector<2x16x1xf32>
    %314 = vector.extract_strided_slice %304 {offsets = [0, 0, 3], sizes = [2, 16, 1], strides = [1, 1, 1]} : vector<2x16x4xf32> to vector<2x16x1xf32>
    %315 = vector.extract_strided_slice %305 {offsets = [0, 0, 0], sizes = [2, 16, 1], strides = [1, 1, 1]} : vector<2x16x4xf32> to vector<2x16x1xf32>
    %316 = vector.extract_strided_slice %305 {offsets = [0, 0, 1], sizes = [2, 16, 1], strides = [1, 1, 1]} : vector<2x16x4xf32> to vector<2x16x1xf32>
    %317 = vector.extract_strided_slice %305 {offsets = [0, 0, 2], sizes = [2, 16, 1], strides = [1, 1, 1]} : vector<2x16x4xf32> to vector<2x16x1xf32>
    %318 = vector.extract_strided_slice %305 {offsets = [0, 0, 3], sizes = [2, 16, 1], strides = [1, 1, 1]} : vector<2x16x4xf32> to vector<2x16x1xf32>
    %cst_111 = arith.constant 5.000000e-01 : f32
    %319 = vector.broadcast %cst_111 : f32 to vector<2x16x1xf32>
    %320 = arith.mulf %319, %313 : vector<2x16x1xf32>
    %321 = arith.subf %311, %320 : vector<2x16x1xf32>
    %cst_112 = arith.constant 5.000000e-01 : f32
    %322 = vector.broadcast %cst_112 : f32 to vector<2x16x1xf32>
    %323 = arith.mulf %322, %314 : vector<2x16x1xf32>
    %324 = arith.subf %312, %323 : vector<2x16x1xf32>
    %cst_113 = arith.constant 5.000000e-01 : f32
    %325 = vector.broadcast %cst_113 : f32 to vector<2x16x1xf32>
    %326 = arith.mulf %325, %313 : vector<2x16x1xf32>
    %327 = arith.addf %311, %326 : vector<2x16x1xf32>
    %cst_114 = arith.constant 5.000000e-01 : f32
    %328 = vector.broadcast %cst_114 : f32 to vector<2x16x1xf32>
    %329 = arith.mulf %328, %314 : vector<2x16x1xf32>
    %330 = arith.addf %312, %329 : vector<2x16x1xf32>
    %cst_115 = arith.constant 5.000000e-01 : f32
    %331 = vector.broadcast %cst_115 : f32 to vector<2x16x1xf32>
    %332 = arith.mulf %331, %317 : vector<2x16x1xf32>
    %333 = arith.subf %315, %332 : vector<2x16x1xf32>
    %cst_116 = arith.constant 5.000000e-01 : f32
    %334 = vector.broadcast %cst_116 : f32 to vector<2x16x1xf32>
    %335 = arith.mulf %334, %318 : vector<2x16x1xf32>
    %336 = arith.subf %316, %335 : vector<2x16x1xf32>
    %cst_117 = arith.constant 5.000000e-01 : f32
    %337 = vector.broadcast %cst_117 : f32 to vector<2x16x1xf32>
    %338 = arith.mulf %337, %317 : vector<2x16x1xf32>
    %339 = arith.addf %315, %338 : vector<2x16x1xf32>
    %cst_118 = arith.constant 5.000000e-01 : f32
    %340 = vector.broadcast %cst_118 : f32 to vector<2x16x1xf32>
    %341 = arith.mulf %340, %318 : vector<2x16x1xf32>
    %342 = arith.addf %316, %341 : vector<2x16x1xf32>
    %343 = arith.subf %327, %321 : vector<2x16x1xf32>
    %344 = arith.subf %330, %324 : vector<2x16x1xf32>
    %345 = arith.mulf %343, %344 : vector<2x16x1xf32>
    %346 = arith.subf %339, %333 : vector<2x16x1xf32>
    %347 = arith.subf %342, %336 : vector<2x16x1xf32>
    %348 = arith.mulf %346, %347 : vector<2x16x1xf32>
    %349 = arith.minimumf %327, %339 : vector<2x16x1xf32>
    %350 = arith.maximumf %321, %333 : vector<2x16x1xf32>
    %351 = arith.subf %349, %350 : vector<2x16x1xf32>
    %cst_119 = arith.constant 0.000000e+00 : f32
    %352 = vector.broadcast %cst_119 : f32 to vector<2x16x1xf32>
    %353 = arith.maximumf %351, %352 : vector<2x16x1xf32>
    %354 = arith.minimumf %330, %342 : vector<2x16x1xf32>
    %355 = arith.maximumf %324, %336 : vector<2x16x1xf32>
    %356 = arith.subf %354, %355 : vector<2x16x1xf32>
    %cst_120 = arith.constant 0.000000e+00 : f32
    %357 = vector.broadcast %cst_120 : f32 to vector<2x16x1xf32>
    %358 = arith.maximumf %356, %357 : vector<2x16x1xf32>
    %359 = arith.mulf %353, %358 : vector<2x16x1xf32>
    %360 = arith.addf %345, %348 : vector<2x16x1xf32>
    %361 = arith.subf %360, %359 : vector<2x16x1xf32>
    %cst_121 = arith.constant 1.000000e-07 : f32
    %362 = vector.broadcast %cst_121 : f32 to vector<2x16x1xf32>
    %363 = arith.addf %361, %362 : vector<2x16x1xf32>
    %364 = tpu.reciprocal %363 {approx = true} : vector<2x16x1xf32> -> vector<2x16x1xf32>
    %365 = arith.mulf %359, %364 : vector<2x16x1xf32>
    %366 = arith.maximumf %327, %339 : vector<2x16x1xf32>
    %367 = arith.minimumf %321, %333 : vector<2x16x1xf32>
    %368 = arith.subf %366, %367 : vector<2x16x1xf32>
    %369 = arith.maximumf %330, %342 : vector<2x16x1xf32>
    %370 = arith.minimumf %324, %336 : vector<2x16x1xf32>
    %371 = arith.subf %369, %370 : vector<2x16x1xf32>
    %372 = arith.mulf %368, %371 : vector<2x16x1xf32>
    %373 = arith.subf %372, %361 : vector<2x16x1xf32>
    %cst_122 = arith.constant 1.000000e-07 : f32
    %374 = vector.broadcast %cst_122 : f32 to vector<2x16x1xf32>
    %375 = arith.addf %372, %374 : vector<2x16x1xf32>
    %376 = tpu.reciprocal %375 {approx = true} : vector<2x16x1xf32> -> vector<2x16x1xf32>
    %377 = arith.mulf %373, %376 : vector<2x16x1xf32>
    %378 = arith.subf %365, %377 : vector<2x16x1xf32>
    %379 = arith.mulf %310, %306 : vector<2x16x1xf32>
    %380 = vector.shape_cast %379 : vector<2x16x1xf32> to vector<1x2x16x1xf32>
    %cst_123 = arith.constant dense<0.000000e+00> : vector<1xf32>
    %381 = vector.multi_reduction <add>, %380, %cst_123 [1, 2, 3] : vector<1x2x16x1xf32> to vector<1xf32>
    %382 = vector.shape_cast %381 : vector<1xf32> to vector<1x1x1x1xf32>
    %383 = vector.extract %382[0, 0, 0, 0] : f32 from vector<1x1x1x1xf32>
    %cst_124 = arith.constant 1.000000e+00 : f32
    %384 = vector.broadcast %cst_124 : f32 to vector<2x16x1xf32>
    %385 = arith.subf %384, %378 : vector<2x16x1xf32>
    %386 = arith.mulf %385, %306 : vector<2x16x1xf32>
    %387 = vector.shape_cast %386 : vector<2x16x1xf32> to vector<1x2x16x1xf32>
    %cst_125 = arith.constant dense<0.000000e+00> : vector<1xf32>
    %388 = vector.multi_reduction <add>, %387, %cst_125 [1, 2, 3] : vector<1x2x16x1xf32> to vector<1xf32>
    %389 = vector.shape_cast %388 : vector<1xf32> to vector<1x1x1x1xf32>
    %390 = vector.extract %389[0, 0, 0, 0] : f32 from vector<1x1x1x1xf32>
    %391 = vector.broadcast %383 : f32 to vector<1x1xf32>
    %392 = arith.mulf %391, %6 : vector<1x1xf32>
    %393 = vector.broadcast %390 : f32 to vector<1x1xf32>
    %394 = arith.mulf %393, %6 : vector<1x1xf32>
    %395 = tpu.iota {dimensions = array<i32: 1>} : vector<1x128xi32>
    %cst_126 = arith.constant 0.000000e+00 : f32
    %396 = vector.broadcast %cst_126 : f32 to vector<1x128xf32>
    %c0_i32 = arith.constant 0 : i32
    %397 = vector.broadcast %c0_i32 : i32 to vector<1x128xi32>
    %398 = arith.cmpi eq, %395, %397 : vector<1x128xi32>
    %cst_127 = arith.constant 0.000000e+00 : f32
    %399 = vector.shape_cast %57 : vector<1x1xf32> to vector<1x1xf32>
    %400 = vector.broadcast %399 : vector<1x1xf32> to vector<1x128xf32>
    %401 = vector.broadcast %cst_127 : f32 to vector<1x128xf32>
    %402 = arith.select %398, %400, %401 : vector<1x128xi1>, vector<1x128xf32>
    %403 = arith.addf %396, %402 : vector<1x128xf32>
    %c1_i32 = arith.constant 1 : i32
    %404 = vector.broadcast %c1_i32 : i32 to vector<1x128xi32>
    %405 = arith.cmpi eq, %395, %404 : vector<1x128xi32>
    %cst_128 = arith.constant 0.000000e+00 : f32
    %406 = vector.broadcast %78 : f32 to vector<1x128xf32>
    %407 = vector.broadcast %cst_128 : f32 to vector<1x128xf32>
    %408 = arith.select %405, %406, %407 : vector<1x128xi1>, vector<1x128xf32>
    %409 = arith.addf %403, %408 : vector<1x128xf32>
    %c2_i32 = arith.constant 2 : i32
    %410 = vector.broadcast %c2_i32 : i32 to vector<1x128xi32>
    %411 = arith.cmpi eq, %395, %410 : vector<1x128xi32>
    %cst_129 = arith.constant 0.000000e+00 : f32
    %412 = vector.shape_cast %111 : vector<1x1xf32> to vector<1x1xf32>
    %413 = vector.broadcast %412 : vector<1x1xf32> to vector<1x128xf32>
    %414 = vector.broadcast %cst_129 : f32 to vector<1x128xf32>
    %415 = arith.select %411, %413, %414 : vector<1x128xi1>, vector<1x128xf32>
    %416 = arith.addf %409, %415 : vector<1x128xf32>
    %c3_i32_130 = arith.constant 3 : i32
    %417 = vector.broadcast %c3_i32_130 : i32 to vector<1x128xi32>
    %418 = arith.cmpi eq, %395, %417 : vector<1x128xi32>
    %cst_131 = arith.constant 0.000000e+00 : f32
    %419 = vector.shape_cast %199 : vector<1x1xf32> to vector<1x1xf32>
    %420 = vector.broadcast %419 : vector<1x1xf32> to vector<1x128xf32>
    %421 = vector.broadcast %cst_131 : f32 to vector<1x128xf32>
    %422 = arith.select %418, %420, %421 : vector<1x128xi1>, vector<1x128xf32>
    %423 = arith.addf %416, %422 : vector<1x128xf32>
    %c4_i32 = arith.constant 4 : i32
    %424 = vector.broadcast %c4_i32 : i32 to vector<1x128xi32>
    %425 = arith.cmpi eq, %395, %424 : vector<1x128xi32>
    %cst_132 = arith.constant 0.000000e+00 : f32
    %426 = vector.shape_cast %201 : vector<1x1xf32> to vector<1x1xf32>
    %427 = vector.broadcast %426 : vector<1x1xf32> to vector<1x128xf32>
    %428 = vector.broadcast %cst_132 : f32 to vector<1x128xf32>
    %429 = arith.select %425, %427, %428 : vector<1x128xi1>, vector<1x128xf32>
    %430 = arith.addf %423, %429 : vector<1x128xf32>
    %c5_i32 = arith.constant 5 : i32
    %431 = vector.broadcast %c5_i32 : i32 to vector<1x128xi32>
    %432 = arith.cmpi eq, %395, %431 : vector<1x128xi32>
    %cst_133 = arith.constant 0.000000e+00 : f32
    %433 = vector.broadcast %244 : f32 to vector<1x128xf32>
    %434 = vector.broadcast %cst_133 : f32 to vector<1x128xf32>
    %435 = arith.select %432, %433, %434 : vector<1x128xi1>, vector<1x128xf32>
    %436 = arith.addf %430, %435 : vector<1x128xf32>
    %c6_i32 = arith.constant 6 : i32
    %437 = vector.broadcast %c6_i32 : i32 to vector<1x128xi32>
    %438 = arith.cmpi eq, %395, %437 : vector<1x128xi32>
    %cst_134 = arith.constant 0.000000e+00 : f32
    %439 = vector.broadcast %253 : f32 to vector<1x128xf32>
    %440 = vector.broadcast %cst_134 : f32 to vector<1x128xf32>
    %441 = arith.select %438, %439, %440 : vector<1x128xi1>, vector<1x128xf32>
    %442 = arith.addf %436, %441 : vector<1x128xf32>
    %c7_i32 = arith.constant 7 : i32
    %443 = vector.broadcast %c7_i32 : i32 to vector<1x128xi32>
    %444 = arith.cmpi eq, %395, %443 : vector<1x128xi32>
    %cst_135 = arith.constant 0.000000e+00 : f32
    %445 = vector.shape_cast %303 : vector<1x1xf32> to vector<1x1xf32>
    %446 = vector.broadcast %445 : vector<1x1xf32> to vector<1x128xf32>
    %447 = vector.broadcast %cst_135 : f32 to vector<1x128xf32>
    %448 = arith.select %444, %446, %447 : vector<1x128xi1>, vector<1x128xf32>
    %449 = arith.addf %442, %448 : vector<1x128xf32>
    %c8_i32 = arith.constant 8 : i32
    %450 = vector.broadcast %c8_i32 : i32 to vector<1x128xi32>
    %451 = arith.cmpi eq, %395, %450 : vector<1x128xi32>
    %cst_136 = arith.constant 0.000000e+00 : f32
    %452 = vector.shape_cast %392 : vector<1x1xf32> to vector<1x1xf32>
    %453 = vector.broadcast %452 : vector<1x1xf32> to vector<1x128xf32>
    %454 = vector.broadcast %cst_136 : f32 to vector<1x128xf32>
    %455 = arith.select %451, %453, %454 : vector<1x128xi1>, vector<1x128xf32>
    %456 = arith.addf %449, %455 : vector<1x128xf32>
    %c9_i32 = arith.constant 9 : i32
    %457 = vector.broadcast %c9_i32 : i32 to vector<1x128xi32>
    %458 = arith.cmpi eq, %395, %457 : vector<1x128xi32>
    %cst_137 = arith.constant 0.000000e+00 : f32
    %459 = vector.shape_cast %394 : vector<1x1xf32> to vector<1x1xf32>
    %460 = vector.broadcast %459 : vector<1x1xf32> to vector<1x128xf32>
    %461 = vector.broadcast %cst_137 : f32 to vector<1x128xf32>
    %462 = arith.select %458, %460, %461 : vector<1x128xi1>, vector<1x128xf32>
    %463 = arith.addf %456, %462 : vector<1x128xf32>
    %c0_138 = arith.constant 0 : index
    %c0_139 = arith.constant 0 : index
    %464 = vector.load %arg16[%c0_138, %c0_139] : memref<1x128xf32, #tpu.memory_space<vmem>>, vector<1x128xf32>
    tpu.vector_store %arg16[%c0_138, %c0_139], %463 {strides = array<i32>} : memref<1x128xf32, #tpu.memory_space<vmem>>, vector<1x128xf32>,
    return
  }
}

</mosaic_0001>

<llo_original>
// kernel: _fused_criterion.1
$region0: #{_fused_criterion.1}
  #allocation0 [shape = 'u32[]', space=smem, size = 0x4, offset = 0x4, fixed_abs, tag = 'smem constant byte address 0x4 - core index']
  #allocation1 [shape = 'u32[144,128]{1,0:T(1,128)}', space=vmem, size = 0x12000, scoped, tag = 'internal scratch']
  %s0 = inlined_call_operand.vmem [shape: f32[2,8], index: 0, kind: input, shape index: {}]
  %s1 = inlined_call_operand.vmem [shape: f32[2,16,4], index: 1, kind: input, shape index: {}]
  %s2 = inlined_call_operand.vmem [shape: s32[2,16,1], index: 2, kind: input, shape index: {}]
  %s3 = inlined_call_operand.vmem [shape: f32[2,16,1], index: 3, kind: input, shape index: {}]
  %s4 = inlined_call_operand.vmem [shape: f32[2,16,4], index: 4, kind: input, shape index: {}]
  %s5 = inlined_call_operand.vmem [shape: f32[2,16,4], index: 5, kind: input, shape index: {}]
  %s6 = inlined_call_operand.vmem [shape: f32[32,51], index: 6, kind: input, shape index: {}]
  %s7 = inlined_call_operand.vmem [shape: f32[32,34], index: 7, kind: input, shape index: {}]
  %s8 = inlined_call_operand.vmem [shape: f32[32,17], index: 8, kind: input, shape index: {}]
  %s9 = inlined_call_operand.vmem [shape: f32[32,17], index: 9, kind: input, shape index: {}]
  %s10 = inlined_call_operand.vmem [shape: f32[32,1], index: 10, kind: input, shape index: {}]
  %s11 = inlined_call_operand.vmem [shape: f32[34,17], index: 11, kind: input, shape index: {}]
  %s12 = inlined_call_operand.vmem [shape: f32[2,16,4], index: 12, kind: input, shape index: {}]
  %s13 = inlined_call_operand.vmem [shape: s32[2,16,1], index: 13, kind: input, shape index: {}]
  %s14 = inlined_call_operand.vmem [shape: f32[2,16,4], index: 14, kind: input, shape index: {}]
  %s15 = inlined_call_operand.vmem [shape: f32[2,16,4], index: 15, kind: input, shape index: {}]
  %s16 = inlined_call_operand.vmem [shape: f32[1,128], index: 16, kind: output, shape index: {}]
  %s17 = sld [smem:[#allocation0]]
  $region74: #{_fused_criterion.1} parent=0
    _
  %s19 = ssub.s32 1, %s17
  %s20 = scalar_select 0, %s19, %s17
  // Predicated region
  $region2: #{_fused_criterion.1} parent=0 // pred_check
    _
  $region3: #{_fused_criterion.1} parent=0 // pred_check_branch
    %22 = sbr.rel (0) target = $region5
  $region4: #{_fused_criterion.1} parent=0 // pred_region
    _
  $region5: #{_fused_criterion.1} parent=0 // pred_fallthru
    _
  // Predicated region
  $region6: #{_fused_criterion.1} parent=0 // pred_check
    _
  $region7: #{_fused_criterion.1} parent=0 // pred_check_branch
    %24 = sbr.rel (0) target = $region9
  $region8: #{_fused_criterion.1} parent=0 // pred_region
    _
  $region9: #{_fused_criterion.1} parent=0 // pred_fallthru
    _
  // Predicated region
  $region10: #{_fused_criterion.1} parent=0 // pred_check
    _
  $region11: #{_fused_criterion.1} parent=0 // pred_check_branch
    %26 = sbr.rel (0) target = $region13
  $region12: #{_fused_criterion.1} parent=0 // pred_region
    _
  $region13: #{_fused_criterion.1} parent=0 // pred_fallthru
    _
  // Predicated region
  $region14: #{_fused_criterion.1} parent=0 // pred_check
    _
  $region15: #{_fused_criterion.1} parent=0 // pred_check_branch
    %28 = sbr.rel (0) target = $region17
  $region16: #{_fused_criterion.1} parent=0 // pred_region
    _
  $region17: #{_fused_criterion.1} parent=0 // pred_fallthru
    _
  // Predicated region
  $region18: #{_fused_criterion.1} parent=0 // pred_check
    _
  $region19: #{_fused_criterion.1} parent=0 // pred_check_branch
    %30 = sbr.rel (0) target = $region21
  $region20: #{_fused_criterion.1} parent=0 // pred_region
    _
  $region21: #{_fused_criterion.1} parent=0 // pred_fallthru
    _
  // Predicated region
  $region22: #{_fused_criterion.1} parent=0 // pred_check
    _
  $region23: #{_fused_criterion.1} parent=0 // pred_check_branch
    %32 = sbr.rel (0) target = $region25
  $region24: #{_fused_criterion.1} parent=0 // pred_region
    _
  $region25: #{_fused_criterion.1} parent=0 // pred_fallthru
    _
  // Predicated region
  $region26: #{_fused_criterion.1} parent=0 // pred_check
    _
  $region27: #{_fused_criterion.1} parent=0 // pred_check_branch
    %34 = sbr.rel (0) target = $region29
  $region28: #{_fused_criterion.1} parent=0 // pred_region
    _
  $region29: #{_fused_criterion.1} parent=0 // pred_fallthru
    _
  // Predicated region
  $region30: #{_fused_criterion.1} parent=0 // pred_check
    _
  $region31: #{_fused_criterion.1} parent=0 // pred_check_branch
    %36 = sbr.rel (0) target = $region33
  $region32: #{_fused_criterion.1} parent=0 // pred_region
    _
  $region33: #{_fused_criterion.1} parent=0 // pred_fallthru
    _
  // Predicated region
  $region34: #{_fused_criterion.1} parent=0 // pred_check
    _
  $region35: #{_fused_criterion.1} parent=0 // pred_check_branch
    %38 = sbr.rel (0) target = $region37
  $region36: #{_fused_criterion.1} parent=0 // pred_region
    _
  $region37: #{_fused_criterion.1} parent=0 // pred_fallthru
    _
  // Predicated region
  $region38: #{_fused_criterion.1} parent=0 // pred_check
    _
  $region39: #{_fused_criterion.1} parent=0 // pred_check_branch
    %40 = sbr.rel (0) target = $region41
  $region40: #{_fused_criterion.1} parent=0 // pred_region
    _
  $region41: #{_fused_criterion.1} parent=0 // pred_fallthru
    _
  // Predicated region
  $region42: #{_fused_criterion.1} parent=0 // pred_check
    _
  $region43: #{_fused_criterion.1} parent=0 // pred_check_branch
    %42 = sbr.rel (0) target = $region45
  $region44: #{_fused_criterion.1} parent=0 // pred_region
    _
  $region45: #{_fused_criterion.1} parent=0 // pred_fallthru
    _
  // Predicated region
  $region46: #{_fused_criterion.1} parent=0 // pred_check
    _
  $region47: #{_fused_criterion.1} parent=0 // pred_check_branch
    %44 = sbr.rel (0) target = $region49
  $region48: #{_fused_criterion.1} parent=0 // pred_region
    _
  $region49: #{_fused_criterion.1} parent=0 // pred_fallthru
    _
  // Predicated region
  $region50: #{_fused_criterion.1} parent=0 // pred_check
    _
  $region51: #{_fused_criterion.1} parent=0 // pred_check_branch
    %46 = sbr.rel (0) target = $region53
  $region52: #{_fused_criterion.1} parent=0 // pred_region
    _
  $region53: #{_fused_criterion.1} parent=0 // pred_fallthru
    _
  // Predicated region
  $region54: #{_fused_criterion.1} parent=0 // pred_check
    _
  $region55: #{_fused_criterion.1} parent=0 // pred_check_branch
    %48 = sbr.rel (0) target = $region57
  $region56: #{_fused_criterion.1} parent=0 // pred_region
    _
  $region57: #{_fused_criterion.1} parent=0 // pred_fallthru
    _
  // Predicated region
  $region58: #{_fused_criterion.1} parent=0 // pred_check
    _
  $region59: #{_fused_criterion.1} parent=0 // pred_check_branch
    %50 = sbr.rel (0) target = $region61
  $region60: #{_fused_criterion.1} parent=0 // pred_region
    _
  $region61: #{_fused_criterion.1} parent=0 // pred_fallthru
    _
  // Predicated region
  $region62: #{_fused_criterion.1} parent=0 // pred_check
    _
  $region63: #{_fused_criterion.1} parent=0 // pred_check_branch
    %52 = sbr.rel (0) target = $region65
  $region64: #{_fused_criterion.1} parent=0 // pred_region
    _
  $region65: #{_fused_criterion.1} parent=0 // pred_fallthru
    _
  %v53 = vld [vmem:[%s0] sm:$0x3]
  %v54 = vrcp.pop %v53
  %v55 = vmul.f32 1.0, %v54
  %v56 = vld [vmem:[%s1] sm:$0xff]
  %v57 = vld [vmem:[%s1 + $0x8] sm:$0xff]
  %v58 = vld [vmem:[%s1 + $0x10] sm:$0xff]
  %v59 = vld [vmem:[%s1 + $0x18] sm:$0xff]
  %v60 = vlaneseq
  %v61 = vand.u32 %v60, 127
  %v62 = vld [vmem:[%s2] sm:$0xff]
  %v63 = vld [vmem:[%s2 + $0x8] sm:$0xff]
  %v64 = vld [vmem:[%s2 + $0x10] sm:$0xff]
  %v65 = vld [vmem:[%s2 + $0x18] sm:$0xff]
  %66 = vset.pattern.permute.xlu0 0
  %67 = vperm.xlu0 %66, %v62
  %v68 = vpop.permute.xlu0 %67
  %69 = vset.pattern.permute.xlu0 0
  %70 = vperm.xlu0 %69, %v63
  %v71 = vpop.permute.xlu0 %70
  %72 = vset.pattern.permute.xlu0 0
  %73 = vperm.xlu0 %72, %v64
  %v74 = vpop.permute.xlu0 %73
  %75 = vset.pattern.permute.xlu0 0
  %76 = vperm.xlu0 %75, %v65
  %v77 = vpop.permute.xlu0 %76
  %vm78 = vcmp.eq.s32.totalorder %v61, %v68
  %vm79 = vcmp.eq.s32.totalorder %v61, %v71
  %vm80 = vcmp.eq.s32.totalorder %v61, %v74
  %vm81 = vcmp.eq.s32.totalorder %v61, %v77
  %v82 = vsel %vm78, 1, 0
  %v83 = vsel %vm79, 1, 0
  %v84 = vsel %vm80, 1, 0
  %v85 = vsel %vm81, 1, 0
  %v86 = vcvt.s32.f32 %v82
  %v87 = vcvt.s32.f32 %v83
  %v88 = vcvt.s32.f32 %v84
  %v89 = vcvt.s32.f32 %v85
  %v90 = vld [vmem:[%s3] sm:$0xff]
  %v91 = vld [vmem:[%s3 + $0x8] sm:$0xff]
  %v92 = vld [vmem:[%s3 + $0x10] sm:$0xff]
  %v93 = vld [vmem:[%s3 + $0x18] sm:$0xff]
  %v94 = vand.u32 2147483647, %v56
  %v95 = vand.u32 2147483647, %v57
  %v96 = vand.u32 2147483647, %v58
  %v97 = vand.u32 2147483647, %v59
  %v98 = vsub.f32 0.0, %v94
  %v99 = vsub.f32 0.0, %v95
  %v100 = vsub.f32 0.0, %v96
  %v101 = vsub.f32 0.0, %v97
  %v102 = vmul.f32 %v98, 1.442695
  %v103 = vpow.pop %v102
  %v104 = vmul.f32 %v99, 1.442695
  %v105 = vpow.pop %v104
  %v106 = vmul.f32 %v100, 1.442695
  %v107 = vpow.pop %v106
  %v108 = vmul.f32 %v101, 1.442695
  %v109 = vpow.pop %v108
  %v110 = vadd.f32 %v103, 1.0
  %v111 = vadd.f32 %v105, 1.0
  %v112 = vadd.f32 %v107, 1.0
  %v113 = vadd.f32 %v109, 1.0
  %v114 = vrcp.pop %v110
  %v115 = vmul.f32 1.0, %v114
  %v116 = vrcp.pop %v111
  %v117 = vmul.f32 1.0, %v116
  %v118 = vrcp.pop %v112
  %v119 = vmul.f32 1.0, %v118
  %v120 = vrcp.pop %v113
  %v121 = vmul.f32 1.0, %v120
  %vm122 = vcmp.ge.f32.partialorder %v56, 0.0
  %vm123 = vcmp.ge.f32.partialorder %v57, 0.0
  %vm124 = vcmp.ge.f32.partialorder %v58, 0.0
  %vm125 = vcmp.ge.f32.partialorder %v59, 0.0
  %v126 = vmul.f32 %v103, %v115
  %v127 = vmul.f32 %v105, %v117
  %v128 = vmul.f32 %v107, %v119
  %v129 = vmul.f32 %v109, %v121
  %v130 = vsel %vm122, %v115, %v126
  %v131 = vsel %vm123, %v117, %v127
  %v132 = vsel %vm124, %v119, %v128
  %v133 = vsel %vm125, %v121, %v129
  %v134 = vmax.f32 %v56, 0.0
  %v135 = vmax.f32 %v57, 0.0
  %v136 = vmax.f32 %v58, 0.0
  %v137 = vmax.f32 %v59, 0.0
  %v138 = vmul.f32 %v56, %v86
  %v139 = vmul.f32 %v57, %v87
  %v140 = vmul.f32 %v58, %v88
  %v141 = vmul.f32 %v59, %v89
  %v142 = vsub.f32 %v134, %v138
  %v143 = vsub.f32 %v135, %v139
  %v144 = vsub.f32 %v136, %v140
  %v145 = vsub.f32 %v137, %v141
  %v146 = vlog2.pop %v110
  %v147 = vmul.f32 %v146, 0.6931472
  %v148 = vlog2.pop %v111
  %v149 = vmul.f32 %v148, 0.6931472
  %v150 = vlog2.pop %v112
  %v151 = vmul.f32 %v150, 0.6931472
  %v152 = vlog2.pop %v113
  %v153 = vmul.f32 %v152, 0.6931472
  %v154 = vadd.f32 %v142, %v147
  %v155 = vadd.f32 %v143, %v149
  %v156 = vadd.f32 %v144, %v151
  %v157 = vadd.f32 %v145, %v153
  %v158 = vmul.f32 %v130, %v86
  %v159 = vmul.f32 %v131, %v87
  %v160 = vmul.f32 %v132, %v88
  %v161 = vmul.f32 %v133, %v89
  %v162 = vsub.f32 1.0, %v130
  %v163 = vsub.f32 1.0, %v131
  %v164 = vsub.f32 1.0, %v132
  %v165 = vsub.f32 1.0, %v133
  %v166 = vsub.f32 1.0, %v86
  %v167 = vsub.f32 1.0, %v87
  %v168 = vsub.f32 1.0, %v88
  %v169 = vsub.f32 1.0, %v89
  %v170 = vmul.f32 %v162, %v166
  %v171 = vmul.f32 %v163, %v167
  %v172 = vmul.f32 %v164, %v168
  %v173 = vmul.f32 %v165, %v169
  %v174 = vadd.f32 %v158, %v170
  %v175 = vadd.f32 %v159, %v171
  %v176 = vadd.f32 %v160, %v172
  %v177 = vadd.f32 %v161, %v173
  %v178 = vsub.f32 1.0, %v174
  %v179 = vsub.f32 1.0, %v175
  %v180 = vsub.f32 1.0, %v176
  %v181 = vsub.f32 1.0, %v177
  %v182 = vmul.f32 %v86, 0.25
  %v183 = vmul.f32 %v87, 0.25
  %v184 = vmul.f32 %v88, 0.25
  %v185 = vmul.f32 %v89, 0.25
  %v186 = vmul.f32 %v166, 0.75
  %v187 = vmul.f32 %v167, 0.75
  %v188 = vmul.f32 %v168, 0.75
  %v189 = vmul.f32 %v169, 0.75
  %v190 = vadd.f32 %v182, %v186
  %v191 = vadd.f32 %v183, %v187
  %v192 = vadd.f32 %v184, %v188
  %v193 = vadd.f32 %v185, %v189
  %v194 = vmul.f32 %v190, %v154
  %v195 = vmul.f32 %v191, %v155
  %v196 = vmul.f32 %v192, %v156
  %v197 = vmul.f32 %v193, %v157
  %v198 = vmul.f32 %v194, %v178
  %v199 = vmul.f32 %v195, %v179
  %v200 = vmul.f32 %v196, %v180
  %v201 = vmul.f32 %v197, %v181
  %v202 = vmul.f32 %v198, %v178
  %v203 = vmul.f32 %v199, %v179
  %v204 = vmul.f32 %v200, %v180
  %v205 = vmul.f32 %v201, %v181
  %vm206 = vcmask 31744
  %v207 = vsel %vm206, %v202, 0.0
  %v208 = vsel %vm206, %v203, 0.0
  %v209 = vadd.f32 %v207, %v208
  %v210 = vsel %vm206, %v204, 0.0
  %v211 = vadd.f32 %v209, %v210
  %v212 = vsel %vm206, %v205, 0.0
  %v213 = vadd.f32 %v211, %v212
  %214 = vadd.xlane.f32.xlu0 %v213
  %v215 = vpop.xlane.xlu0 %214
  %v216 = vrot.slane %v215, 4
  %v217 = vadd.f32 %v215, %v216
  %v218 = vrot.slane %v217, 2
  %v219 = vadd.f32 %v217, %v218
  %v220 = vrot.slane %v219, 1
  %v221 = vadd.f32 %v219, %v220
  %s222 = vtos %v221
  %v223 = vstv %s222
  %v224 = vmul.f32 %v223, %v55
  %v225 = vsel %vm206, %v138, 0.0
  %226 = vadd.xlane.f32.xlu0 %v225
  %v227 = vpop.xlane.xlu0 %226
  %v228 = vsel %vm206, %v139, 0.0
  %229 = vadd.xlane.f32.xlu0 %v228
  %v230 = vpop.xlane.xlu0 %229
  %v231 = vsel %vm206, %v140, 0.0
  %232 = vadd.xlane.f32.xlu0 %v231
  %v233 = vpop.xlane.xlu0 %232
  %v234 = vsel %vm206, %v141, 0.0
  %235 = vadd.xlane.f32.xlu0 %v234
  %v236 = vpop.xlane.xlu0 %235
  %v237 = vsel %vm206, %v56, -inf
  %238 = vmax.xlane.f32.xlu0 %v237
  %v239 = vpop.xlane.xlu0 %238
  %v240 = vsel %vm206, %v57, -inf
  %241 = vmax.xlane.f32.xlu0 %v240
  %v242 = vpop.xlane.xlu0 %241
  %v243 = vsel %vm206, %v58, -inf
  %244 = vmax.xlane.f32.xlu0 %v243
  %v245 = vpop.xlane.xlu0 %244
  %v246 = vsel %vm206, %v59, -inf
  %247 = vmax.xlane.f32.xlu0 %v246
  %v248 = vpop.xlane.xlu0 %247
  %vm249 = vcmp.ge.f32.partialorder %v227, %v239
  %vm250 = vcmp.ge.f32.partialorder %v230, %v242
  %vm251 = vcmp.ge.f32.partialorder %v233, %v245
  %vm252 = vcmp.ge.f32.partialorder %v236, %v248
  %v253 = vsel %vm249, 1, 0
  %v254 = vsel %vm250, 1, 0
  %v255 = vsel %vm251, 1, 0
  %v256 = vsel %vm252, 1, 0
  %v257 = vcvt.s32.f32 %v253
  %v258 = vcvt.s32.f32 %v254
  %v259 = vcvt.s32.f32 %v255
  %v260 = vcvt.s32.f32 %v256
  %vm261 = vcmask 7168
  %v262 = vsel %vm261, %v90, 0.0
  %v263 = vsel %vm261, %v91, 0.0
  %v264 = vadd.f32 %v262, %v263
  %v265 = vsel %vm261, %v92, 0.0
  %v266 = vadd.f32 %v264, %v265
  %v267 = vsel %vm261, %v93, 0.0
  %v268 = vadd.f32 %v266, %v267
  %269 = vadd.xlane.f32.xlu0 %v268
  %v270 = vpop.xlane.xlu0 %269
  %v271 = vrot.slane %v270, 4
  %v272 = vadd.f32 %v270, %v271
  %v273 = vrot.slane %v272, 2
  %v274 = vadd.f32 %v272, %v273
  %v275 = vrot.slane %v274, 1
  %v276 = vadd.f32 %v274, %v275
  %s277 = vtos %v276
  %s278 = smax.f32 %s277, 1.0
  %v279 = vmul.f32 %v257, %v90
  %v280 = vmul.f32 %v258, %v91
  %v281 = vmul.f32 %v259, %v92
  %v282 = vmul.f32 %v260, %v93
  %v283 = vsel %vm261, %v279, 0.0
  %v284 = vsel %vm261, %v280, 0.0
  %v285 = vadd.f32 %v283, %v284
  %v286 = vsel %vm261, %v281, 0.0
  %v287 = vadd.f32 %v285, %v286
  %v288 = vsel %vm261, %v282, 0.0
  %v289 = vadd.f32 %v287, %v288
  %290 = vadd.xlane.f32.xlu0 %v289
  %v291 = vpop.xlane.xlu0 %290
  %v292 = vrot.slane %v291, 4
  %v293 = vadd.f32 %v291, %v292
  %v294 = vrot.slane %v293, 2
  %v295 = vadd.f32 %v293, %v294
  %v296 = vrot.slane %v295, 1
  %v297 = vadd.f32 %v295, %v296
  %s298 = vtos %v297
  %v299 = vstv %s278
  %v300 = vrcp.pop %v299
  %s301 = vtos %v300
  %s302 = smul.f32 %s298, %s301
  %s303 = ssub.f32 1.0, %s302
  %s304 = smul.f32 %s303, 100.0
  %vm305 = vcmp.lt.s32.totalorder %v61, 3
  %v306 = vsel %vm305, %v56, -1e+30
  %v307 = vsel %vm305, %v57, -1e+30
  %v308 = vsel %vm305, %v58, -1e+30
  %v309 = vsel %vm305, %v59, -1e+30
  %v310 = vsel %vm206, %v306, -inf
  %311 = vmax.xlane.f32.xlu0 %v310
  %v312 = vpop.xlane.xlu0 %311
  %v313 = vsel %vm206, %v307, -inf
  %314 = vmax.xlane.f32.xlu0 %v313
  %v315 = vpop.xlane.xlu0 %314
  %v316 = vsel %vm206, %v308, -inf
  %317 = vmax.xlane.f32.xlu0 %v316
  %v318 = vpop.xlane.xlu0 %317
  %v319 = vsel %vm206, %v309, -inf
  %320 = vmax.xlane.f32.xlu0 %v319
  %v321 = vpop.xlane.xlu0 %320
  %vm322 = vcmp.ge.f32.partialorder %v312, %v56
  %vm323 = vcmp.ge.f32.partialorder %v315, %v57
  %vm324 = vcmp.ge.f32.partialorder %v318, %v58
  %vm325 = vcmp.ge.f32.partialorder %v321, %v59
  %v326 = vsel %vm322, 1, 0
  %v327 = vsel %vm323, 1, 0
  %v328 = vsel %vm324, 1, 0
  %v329 = vsel %vm325, 1, 0
  %v330 = vcvt.s32.f32 %v326
  %v331 = vcvt.s32.f32 %v327
  %v332 = vcvt.s32.f32 %v328
  %v333 = vcvt.s32.f32 %v329
  %336 = vrot.lane.b32.xlu0 %v330, 125
  %v337 = vpop.permute.xlu0 %336
  %338 = vrot.lane.b32.xlu0 %v331, 125
  %v339 = vpop.permute.xlu0 %338
  %v342 = vsel %vm261, %v337, 0.0
  %v343 = vsel %vm261, %v339, 0.0
  %v344 = vadd.f32 %v342, %v343
  %345 = vadd.xlane.f32.xlu0 %v344
  %v346 = vpop.xlane.xlu0 %345
  %v347 = vrot.slane %v346, 4
  %v348 = vadd.f32 %v346, %v347
  %v349 = vrot.slane %v348, 2
  %v350 = vadd.f32 %v348, %v349
  %v351 = vrot.slane %v350, 1
  %v352 = vadd.f32 %v350, %v351
  %s353 = vtos %v352
  %v354 = vstv %s353
  %v355 = vsub.f32 %v354, %v53
  %v356 = vand.u32 2147483647, %v355
  %v357 = vadd.f32 %v356, 0.0
  %360 = vrot.lane.b32.xlu0 %v332, 125
  %v361 = vpop.permute.xlu0 %360
  %362 = vrot.lane.b32.xlu0 %v333, 125
  %v363 = vpop.permute.xlu0 %362
  %v366 = vsel %vm261, %v361, 0.0
  %v367 = vsel %vm261, %v363, 0.0
  %v368 = vadd.f32 %v366, %v367
  %369 = vadd.xlane.f32.xlu0 %v368
  %v370 = vpop.xlane.xlu0 %369
  %v371 = vrot.slane %v370, 4
  %v372 = vadd.f32 %v370, %v371
  %v373 = vrot.slane %v372, 2
  %v374 = vadd.f32 %v372, %v373
  %v375 = vrot.slane %v374, 1
  %v376 = vadd.f32 %v374, %v375
  %s377 = vtos %v376
  %v378 = vstv %s377
  %v379 = vsub.f32 %v378, %v53
  %v380 = vand.u32 2147483647, %v379
  %v382 = vrot.slane %v380, 1
  %v384 = vadd.f32 %v357, %v382
  %v385 = vmul.f32 %v384, 0.5
  %v386 = vld [vmem:[%s4] sm:$0xff]
  %v387 = vld [vmem:[%s4 + $0x8] sm:$0xff]
  %v388 = vld [vmem:[%s4 + $0x10] sm:$0xff]
  %v389 = vld [vmem:[%s4 + $0x18] sm:$0xff]
  %v390 = vld [vmem:[%s5] sm:$0xff]
  %v391 = vld [vmem:[%s5 + $0x8] sm:$0xff]
  %v392 = vld [vmem:[%s5 + $0x10] sm:$0xff]
  %v393 = vld [vmem:[%s5 + $0x18] sm:$0xff]
  %v394 = vsub.f32 %v386, %v390
  %v395 = vsub.f32 %v387, %v391
  %v396 = vsub.f32 %v388, %v392
  %v397 = vsub.f32 %v389, %v393
  %v398 = vand.u32 2147483647, %v394
  %v399 = vand.u32 2147483647, %v395
  %v400 = vand.u32 2147483647, %v396
  %v401 = vand.u32 2147483647, %v397
  %v402 = vsel %vm206, %v398, 0.0
  %403 = vadd.xlane.f32.xlu0 %v402
  %v404 = vpop.xlane.xlu0 %403
  %v405 = vsel %vm206, %v399, 0.0
  %406 = vadd.xlane.f32.xlu0 %v405
  %v407 = vpop.xlane.xlu0 %406
  %v408 = vsel %vm206, %v400, 0.0
  %409 = vadd.xlane.f32.xlu0 %v408
  %v410 = vpop.xlane.xlu0 %409
  %v411 = vsel %vm206, %v401, 0.0
  %412 = vadd.xlane.f32.xlu0 %v411
  %v413 = vpop.xlane.xlu0 %412
  %v414 = vmul.f32 %v386, 0.5
  %v415 = vmul.f32 %v387, 0.5
  %v416 = vmul.f32 %v388, 0.5
  %v417 = vmul.f32 %v389, 0.5
  %422 = vrot.lane.b32.xlu0 %v414, 126
  %v423 = vpop.permute.xlu0 %422
  %424 = vrot.lane.b32.xlu0 %v415, 126
  %v425 = vpop.permute.xlu0 %424
  %426 = vrot.lane.b32.xlu0 %v416, 126
  %v427 = vpop.permute.xlu0 %426
  %428 = vrot.lane.b32.xlu0 %v417, 126
  %v429 = vpop.permute.xlu0 %428
  %v434 = vsub.f32 %v386, %v423
  %v435 = vsub.f32 %v387, %v425
  %v436 = vsub.f32 %v388, %v427
  %v437 = vsub.f32 %v389, %v429
  %v438 = vadd.f32 %v386, %v423
  %v439 = vadd.f32 %v387, %v425
  %v440 = vadd.f32 %v388, %v427
  %v441 = vadd.f32 %v389, %v429
  %v442 = vmul.f32 %v390, 0.5
  %v443 = vmul.f32 %v391, 0.5
  %v444 = vmul.f32 %v392, 0.5
  %v445 = vmul.f32 %v393, 0.5
  %450 = vrot.lane.b32.xlu0 %v442, 126
  %v451 = vpop.permute.xlu0 %450
  %452 = vrot.lane.b32.xlu0 %v443, 126
  %v453 = vpop.permute.xlu0 %452
  %454 = vrot.lane.b32.xlu0 %v444, 126
  %v455 = vpop.permute.xlu0 %454
  %456 = vrot.lane.b32.xlu0 %v445, 126
  %v457 = vpop.permute.xlu0 %456
  %v462 = vsub.f32 %v390, %v451
  %v463 = vsub.f32 %v391, %v453
  %v464 = vsub.f32 %v392, %v455
  %v465 = vsub.f32 %v393, %v457
  %v466 = vadd.f32 %v390, %v451
  %v467 = vadd.f32 %v391, %v453
  %v468 = vadd.f32 %v392, %v455
  %v469 = vadd.f32 %v393, %v457
  %v470 = vsub.f32 %v438, %v434
  %v471 = vsub.f32 %v439, %v435
  %v472 = vsub.f32 %v440, %v436
  %v473 = vsub.f32 %v441, %v437
  %478 = vrot.lane.b32.xlu0 %v470, 127
  %v479 = vpop.permute.xlu0 %478
  %480 = vrot.lane.b32.xlu0 %v471, 127
  %v481 = vpop.permute.xlu0 %480
  %482 = vrot.lane.b32.xlu0 %v472, 127
  %v483 = vpop.permute.xlu0 %482
  %484 = vrot.lane.b32.xlu0 %v473, 127
  %v485 = vpop.permute.xlu0 %484
  %v490 = vmul.f32 %v470, %v479
  %v491 = vmul.f32 %v471, %v481
  %v492 = vmul.f32 %v472, %v483
  %v493 = vmul.f32 %v473, %v485
  %v494 = vsub.f32 %v466, %v462
  %v495 = vsub.f32 %v467, %v463
  %v496 = vsub.f32 %v468, %v464
  %v497 = vsub.f32 %v469, %v465
  %502 = vrot.lane.b32.xlu0 %v494, 127
  %v503 = vpop.permute.xlu0 %502
  %504 = vrot.lane.b32.xlu0 %v495, 127
  %v505 = vpop.permute.xlu0 %504
  %506 = vrot.lane.b32.xlu0 %v496, 127
  %v507 = vpop.permute.xlu0 %506
  %508 = vrot.lane.b32.xlu0 %v497, 127
  %v509 = vpop.permute.xlu0 %508
  %v514 = vmul.f32 %v494, %v503
  %v515 = vmul.f32 %v495, %v505
  %v516 = vmul.f32 %v496, %v507
  %v517 = vmul.f32 %v497, %v509
  %v518 = vmin.f32 %v438, %v466
  %v519 = vmin.f32 %v439, %v467
  %v520 = vmin.f32 %v440, %v468
  %v521 = vmin.f32 %v441, %v469
  %v522 = vmax.f32 %v434, %v462
  %v523 = vmax.f32 %v435, %v463
  %v524 = vmax.f32 %v436, %v464
  %v525 = vmax.f32 %v437, %v465
  %v526 = vsub.f32 %v518, %v522
  %v527 = vsub.f32 %v519, %v523
  %v528 = vsub.f32 %v520, %v524
  %v529 = vsub.f32 %v521, %v525
  %v530 = vmax.f32 %v526, 0.0
  %v531 = vmax.f32 %v527, 0.0
  %v532 = vmax.f32 %v528, 0.0
  %v533 = vmax.f32 %v529, 0.0
  %538 = vrot.lane.b32.xlu0 %v530, 127
  %v539 = vpop.permute.xlu0 %538
  %540 = vrot.lane.b32.xlu0 %v531, 127
  %v541 = vpop.permute.xlu0 %540
  %542 = vrot.lane.b32.xlu0 %v532, 127
  %v543 = vpop.permute.xlu0 %542
  %544 = vrot.lane.b32.xlu0 %v533, 127
  %v545 = vpop.permute.xlu0 %544
  %v550 = vmul.f32 %v530, %v539
  %v551 = vmul.f32 %v531, %v541
  %v552 = vmul.f32 %v532, %v543
  %v553 = vmul.f32 %v533, %v545
  %v554 = vadd.f32 %v490, %v514
  %v555 = vadd.f32 %v491, %v515
  %v556 = vadd.f32 %v492, %v516
  %v557 = vadd.f32 %v493, %v517
  %v558 = vsub.f32 %v554, %v550
  %v559 = vsub.f32 %v555, %v551
  %v560 = vsub.f32 %v556, %v552
  %v561 = vsub.f32 %v557, %v553
  %v562 = vadd.f32 %v558, 1e-07
  %v563 = vadd.f32 %v559, 1e-07
  %v564 = vadd.f32 %v560, 1e-07
  %v565 = vadd.f32 %v561, 1e-07
  %v566 = vrcp.pop %v562
  %v567 = vrcp.pop %v563
  %v568 = vrcp.pop %v564
  %v569 = vrcp.pop %v565
  %v570 = vmul.f32 %v550, %v566
  %v571 = vmul.f32 %v551, %v567
  %v572 = vmul.f32 %v552, %v568
  %v573 = vmul.f32 %v553, %v569
  %v574 = vmax.f32 %v438, %v466
  %v575 = vmax.f32 %v439, %v467
  %v576 = vmax.f32 %v440, %v468
  %v577 = vmax.f32 %v441, %v469
  %v578 = vmin.f32 %v434, %v462
  %v579 = vmin.f32 %v435, %v463
  %v580 = vmin.f32 %v436, %v464
  %v581 = vmin.f32 %v437, %v465
  %v582 = vsub.f32 %v574, %v578
  %v583 = vsub.f32 %v575, %v579
  %v584 = vsub.f32 %v576, %v580
  %v585 = vsub.f32 %v577, %v581
  %590 = vrot.lane.b32.xlu0 %v582, 127
  %v591 = vpop.permute.xlu0 %590
  %592 = vrot.lane.b32.xlu0 %v583, 127
  %v593 = vpop.permute.xlu0 %592
  %594 = vrot.lane.b32.xlu0 %v584, 127
  %v595 = vpop.permute.xlu0 %594
  %596 = vrot.lane.b32.xlu0 %v585, 127
  %v597 = vpop.permute.xlu0 %596
  %v602 = vmul.f32 %v582, %v591
  %v603 = vmul.f32 %v583, %v593
  %v604 = vmul.f32 %v584, %v595
  %v605 = vmul.f32 %v585, %v597
  %v606 = vsub.f32 %v602, %v558
  %v607 = vsub.f32 %v603, %v559
  %v608 = vsub.f32 %v604, %v560
  %v609 = vsub.f32 %v605, %v561
  %v610 = vadd.f32 %v602, 1e-07
  %v611 = vadd.f32 %v603, 1e-07
  %v612 = vadd.f32 %v604, 1e-07
  %v613 = vadd.f32 %v605, 1e-07
  %v614 = vrcp.pop %v610
  %v615 = vrcp.pop %v611
  %v616 = vrcp.pop %v612
  %v617 = vrcp.pop %v613
  %v618 = vmul.f32 %v606, %v614
  %v619 = vmul.f32 %v607, %v615
  %v620 = vmul.f32 %v608, %v616
  %v621 = vmul.f32 %v609, %v617
  %v622 = vsub.f32 %v570, %v618
  %v623 = vsub.f32 %v571, %v619
  %v624 = vsub.f32 %v572, %v620
  %v625 = vsub.f32 %v573, %v621
  %v626 = vmul.f32 %v404, %v90
  %v627 = vmul.f32 %v407, %v91
  %v628 = vmul.f32 %v410, %v92
  %v629 = vmul.f32 %v413, %v93
  %v630 = vsel %vm261, %v626, 0.0
  %v631 = vsel %vm261, %v627, 0.0
  %v632 = vadd.f32 %v630, %v631
  %v633 = vsel %vm261, %v628, 0.0
  %v634 = vadd.f32 %v632, %v633
  %v635 = vsel %vm261, %v629, 0.0
  %v636 = vadd.f32 %v634, %v635
  %637 = vadd.xlane.f32.xlu0 %v636
  %v638 = vpop.xlane.xlu0 %637
  %v639 = vrot.slane %v638, 4
  %v640 = vadd.f32 %v638, %v639
  %v641 = vrot.slane %v640, 2
  %v642 = vadd.f32 %v640, %v641
  %v643 = vrot.slane %v642, 1
  %v644 = vadd.f32 %v642, %v643
  %s645 = vtos %v644
  %v646 = vsub.f32 1.0, %v622
  %v647 = vsub.f32 1.0, %v623
  %v648 = vsub.f32 1.0, %v624
  %v649 = vsub.f32 1.0, %v625
  %v650 = vmul.f32 %v646, %v90
  %v651 = vmul.f32 %v647, %v91
  %v652 = vmul.f32 %v648, %v92
  %v653 = vmul.f32 %v649, %v93
  %v654 = vsel %vm261, %v650, 0.0
  %v655 = vsel %vm261, %v651, 0.0
  %v656 = vadd.f32 %v654, %v655
  %v657 = vsel %vm261, %v652, 0.0
  %v658 = vadd.f32 %v656, %v657
  %v659 = vsel %vm261, %v653, 0.0
  %v660 = vadd.f32 %v658, %v659
  %661 = vadd.xlane.f32.xlu0 %v660
  %v662 = vpop.xlane.xlu0 %661
  %v663 = vrot.slane %v662, 4
  %v664 = vadd.f32 %v662, %v663
  %v665 = vrot.slane %v664, 2
  %v666 = vadd.f32 %v664, %v665
  %v667 = vrot.slane %v666, 1
  %v668 = vadd.f32 %v666, %v667
  %s669 = vtos %v668
  %v670 = vstv %s645
  %v671 = vmul.f32 %v670, %v55
  %v672 = vstv %s669
  %v673 = vmul.f32 %v672, %v55
  %v674 = vld [vmem:[%s6] sm:$0xff]
  %v675 = vld [vmem:[%s6 + $0x8] sm:$0xff]
  %v676 = vld [vmem:[%s6 + $0x10] sm:$0xff]
  %v677 = vld [vmem:[%s6 + $0x18] sm:$0xff]
  %v678 = vld [vmem:[%s7] sm:$0xff]
  %v679 = vld [vmem:[%s7 + $0x8] sm:$0xff]
  %v680 = vld [vmem:[%s7 + $0x10] sm:$0xff]
  %v681 = vld [vmem:[%s7 + $0x18] sm:$0xff]
  %v682 = vsub.f32 %v674, %v678
  %v683 = vsub.f32 %v675, %v679
  %v684 = vsub.f32 %v676, %v680
  %v685 = vsub.f32 %v677, %v681
  %v686 = vld [vmem:[%s11] sm:$0xff]
  %v687 = vld [vmem:[%s11 + $0x8] sm:$0xff]
  %v688 = vld [vmem:[%s11 + $0x10] sm:$0xff]
  %v689 = vld [vmem:[%s11 + $0x18] sm:$0xff]
  %v690 = vld [vmem:[%s11 + $0x20] sm:$0x3]
  %v691 = vand.u32 2147483647, %v682
  %v692 = vand.u32 2147483647, %v683
  %v693 = vand.u32 2147483647, %v684
  %v694 = vand.u32 2147483647, %v685
  %vm695 = vcmask 277504
  %v697 = vsel %vm695, %v691, 0
  %v700 = vsel %vm695, %v692, 0
  %v703 = vsel %vm695, %v693, 0
  %v706 = vsel %vm695, %v694, 0
  %vm708 = vcmask 1041408
  %v710 = vsel %vm708, %v690, 0
  %712 = vmatprep.subr.mxu0 0.0
  %713 = vmatpush1.msra.mxu0 %v686
  %714 = vmatprep.subr.mxu0 0.0
  %715 = vmatpush1.msra.mxu0 %v687
  %716 = vmatprep.subr.mxu0 0.0
  %717 = vmatpush1.msra.mxu0 %v688
  %718 = vmatprep.subr.mxu0 0.0
  %719 = vmatpush1.msra.mxu0 %v689
  %720 = vmatprep.subr.mxu0 0.0
  %721 = vmatpush1.msra.mxu0 %v710
  %722 = vmatprep.subr.mxu0 0.0
  %723 = vmatpush1.msra.mxu0 0.0
  %724 = vmatprep.subr.mxu0 0.0
  %725 = vmatpush1.msra.mxu0 0.0
  %726 = vmatprep.subr.mxu0 0.0
  %727 = vmatpush1.msra.mxu0 0.0
  %728 = vmatprep.subr.mxu0 0.0
  %729 = vmatpush1.msra.mxu0 0.0
  %730 = vmatprep.subr.mxu0 0.0
  %731 = vmatpush1.msra.mxu0 0.0
  %732 = vmatprep.subr.mxu0 0.0
  %733 = vmatpush1.msra.mxu0 0.0
  %734 = vmatprep.subr.mxu0 0.0
  %735 = vmatpush1.msra.mxu0 0.0
  %736 = vmatprep.subr.mxu0 0.0
  %737 = vmatpush1.msra.mxu0 0.0
  %738 = vmatprep.subr.mxu0 0.0
  %739 = vmatpush1.msra.mxu0 0.0
  %740 = vmatprep.subr.mxu0 0.0
  %741 = vmatpush1.msra.mxu0 0.0
  %742 = vmatprep.subr.mxu0 0.0
  %743 = vmatpush1.msra.mxu0 0.0
  %744 = vmatprep.subr.mxu0 0.0
  %745 = vmatpush1.msra.mxu0 0.0
  %746 = vmatprep.subr.mxu0 0.0
  %747 = vmatpush1.msra.mxu0 0.0
  %748 = vmatprep.subr.mxu0 0.0
  %749 = vmatpush1.msra.mxu0 0.0
  %750 = vmatprep.subr.mxu0 0.0
  %751 = vmatpush1.msra.mxu0 0.0
  %752 = vmatprep.subr.mxu0 0.0
  %753 = vmatpush1.msra.mxu0 0.0
  %754 = vmatprep.subr.mxu0 0.0
  %755 = vmatpush1.msra.mxu0 0.0
  %756 = vmatprep.subr.mxu0 0.0
  %757 = vmatpush1.msra.mxu0 0.0
  %758 = vmatprep.subr.mxu0 0.0
  %759 = vmatpush1.msra.mxu0 0.0
  %760 = vmatprep.subr.mxu0 0.0
  %761 = vmatpush1.msra.mxu0 0.0
  %762 = vmatprep.subr.mxu0 0.0
  %763 = vmatpush1.msra.mxu0 0.0
  %764 = vmatprep.subr.mxu0 0.0
  %765 = vmatpush1.msra.mxu0 0.0
  %766 = vmatprep.subr.mxu0 0.0
  %767 = vmatpush1.msra.mxu0 0.0
  %768 = vmatprep.subr.mxu0 0.0
  %769 = vmatpush1.msra.mxu0 0.0
  %770 = vmatprep.subr.mxu0 0.0
  %771 = vmatpush1.msra.mxu0 0.0
  %772 = vmatprep.subr.mxu0 0.0
  %773 = vmatpush1.msra.mxu0 0.0
  %774 = vmatprep.subr.mxu0 0.0
  %775 = vmatpush1.msra.mxu0 0.0
  %776 = vmatprep.mubr.f32.mxu0 0.0
  %777 = vmatmul.mubr.f32.gmra.mrb[0].mxu0 %v697
  %v778 = vpop.f32.mrb[0].mxu0
  %v779 = vadd.f32 0.0, %v778
  %v780 = vpop.f32.mrb[0].mxu0
  %781 = vmatprep.mubr.f32.mxu0 0.0
  %782 = vmatmul.mubr.f32.gmra.mrb[0].mxu0 %v700
  %v783 = vpop.f32.mrb[0].mxu0
  %v784 = vadd.f32 0.0, %v783
  %v785 = vpop.f32.mrb[0].mxu0
  %786 = vmatprep.mubr.f32.mxu0 0.0
  %787 = vmatmul.mubr.f32.gmra.mrb[0].mxu0 %v703
  %v788 = vpop.f32.mrb[0].mxu0
  %v789 = vadd.f32 0.0, %v788
  %v790 = vpop.f32.mrb[0].mxu0
  %791 = vmatprep.mubr.f32.mxu0 0.0
  %792 = vmatmul.mubr.f32.gmra.mrb[0].mxu0 %v706
  %v793 = vpop.f32.mrb[0].mxu0
  %v794 = vadd.f32 0.0, %v793
  %v795 = vpop.f32.mrb[0].mxu0
  %796 = vdwg.mxu0
  %v797 = vmul.f32 %v682, %v682
  %v798 = vmul.f32 %v683, %v683
  %v799 = vmul.f32 %v684, %v684
  %v800 = vmul.f32 %v685, %v685
  %v802 = vsel %vm695, %v797, 0
  %v805 = vsel %vm695, %v798, 0
  %v808 = vsel %vm695, %v799, 0
  %v811 = vsel %vm695, %v800, 0
  %813 = vmatprep.subr.mxu0 0.0
  %814 = vmatpush1.msra.mxu0 %v686
  %815 = vmatprep.subr.mxu0 0.0
  %816 = vmatpush1.msra.mxu0 %v687
  %817 = vmatprep.subr.mxu0 0.0
  %818 = vmatpush1.msra.mxu0 %v688
  %819 = vmatprep.subr.mxu0 0.0
  %820 = vmatpush1.msra.mxu0 %v689
  %821 = vmatprep.subr.mxu0 0.0
  %822 = vmatpush1.msra.mxu0 %v710
  %823 = vmatprep.subr.mxu0 0.0
  %824 = vmatpush1.msra.mxu0 0.0
  %825 = vmatprep.subr.mxu0 0.0
  %826 = vmatpush1.msra.mxu0 0.0
  %827 = vmatprep.subr.mxu0 0.0
  %828 = vmatpush1.msra.mxu0 0.0
  %829 = vmatprep.subr.mxu0 0.0
  %830 = vmatpush1.msra.mxu0 0.0
  %831 = vmatprep.subr.mxu0 0.0
  %832 = vmatpush1.msra.mxu0 0.0
  %833 = vmatprep.subr.mxu0 0.0
  %834 = vmatpush1.msra.mxu0 0.0
  %835 = vmatprep.subr.mxu0 0.0
  %836 = vmatpush1.msra.mxu0 0.0
  %837 = vmatprep.subr.mxu0 0.0
  %838 = vmatpush1.msra.mxu0 0.0
  %839 = vmatprep.subr.mxu0 0.0
  %840 = vmatpush1.msra.mxu0 0.0
  %841 = vmatprep.subr.mxu0 0.0
  %842 = vmatpush1.msra.mxu0 0.0
  %843 = vmatprep.subr.mxu0 0.0
  %844 = vmatpush1.msra.mxu0 0.0
  %845 = vmatprep.subr.mxu0 0.0
  %846 = vmatpush1.msra.mxu0 0.0
  %847 = vmatprep.subr.mxu0 0.0
  %848 = vmatpush1.msra.mxu0 0.0
  %849 = vmatprep.subr.mxu0 0.0
  %850 = vmatpush1.msra.mxu0 0.0
  %851 = vmatprep.subr.mxu0 0.0
  %852 = vmatpush1.msra.mxu0 0.0
  %853 = vmatprep.subr.mxu0 0.0
  %854 = vmatpush1.msra.mxu0 0.0
  %855 = vmatprep.subr.mxu0 0.0
  %856 = vmatpush1.msra.mxu0 0.0
  %857 = vmatprep.subr.mxu0 0.0
  %858 = vmatpush1.msra.mxu0 0.0
  %859 = vmatprep.subr.mxu0 0.0
  %860 = vmatpush1.msra.mxu0 0.0
  %861 = vmatprep.subr.mxu0 0.0
  %862 = vmatpush1.msra.mxu0 0.0
  %863 = vmatprep.subr.mxu0 0.0
  %864 = vmatpush1.msra.mxu0 0.0
  %865 = vmatprep.subr.mxu0 0.0
  %866 = vmatpush1.msra.mxu0 0.0
  %867 = vmatprep.subr.mxu0 0.0
  %868 = vmatpush1.msra.mxu0 0.0
  %869 = vmatprep.subr.mxu0 0.0
  %870 = vmatpush1.msra.mxu0 0.0
  %871 = vmatprep.subr.mxu0 0.0
  %872 = vmatpush1.msra.mxu0 0.0
  %873 = vmatprep.subr.mxu0 0.0
  %874 = vmatpush1.msra.mxu0 0.0
  %875 = vmatprep.subr.mxu0 0.0
  %876 = vmatpush1.msra.mxu0 0.0
  %877 = vmatprep.mubr.f32.mxu0 0.0
  %878 = vmatmul.mubr.f32.gmra.mrb[0].mxu0 %v802
  %v879 = vpop.f32.mrb[0].mxu0
  %v880 = vadd.f32 0.0, %v879
  %v881 = vpop.f32.mrb[0].mxu0
  %882 = vmatprep.mubr.f32.mxu0 0.0
  %883 = vmatmul.mubr.f32.gmra.mrb[0].mxu0 %v805
  %v884 = vpop.f32.mrb[0].mxu0
  %v885 = vadd.f32 0.0, %v884
  %v886 = vpop.f32.mrb[0].mxu0
  %887 = vmatprep.mubr.f32.mxu0 0.0
  %888 = vmatmul.mubr.f32.gmra.mrb[0].mxu0 %v808
  %v889 = vpop.f32.mrb[0].mxu0
  %v890 = vadd.f32 0.0, %v889
  %v891 = vpop.f32.mrb[0].mxu0
  %892 = vmatprep.mubr.f32.mxu0 0.0
  %893 = vmatmul.mubr.f32.gmra.mrb[0].mxu0 %v811
  %v894 = vpop.f32.mrb[0].mxu0
  %v895 = vadd.f32 0.0, %v894
  %v896 = vpop.f32.mrb[0].mxu0
  %897 = vdwg.mxu0
  %v898 = vld [vmem:[%s8] sm:$0xff]
  %v899 = vld [vmem:[%s8 + $0x8] sm:$0xff]
  %v900 = vld [vmem:[%s8 + $0x10] sm:$0xff]
  %v901 = vld [vmem:[%s8 + $0x18] sm:$0xff]
  %v902 = vld [vmem:[%s10] sm:$0xff]
  %v903 = vld [vmem:[%s10 + $0x8] sm:$0xff]
  %v904 = vld [vmem:[%s10 + $0x10] sm:$0xff]
  %v905 = vld [vmem:[%s10 + $0x18] sm:$0xff]
  %v906 = vmul.f32 %v779, %v898
  %v907 = vmul.f32 %v784, %v899
  %v908 = vmul.f32 %v789, %v900
  %v909 = vmul.f32 %v794, %v901
  %vm910 = vcmask 138240
  %v911 = vsel %vm910, %v906, 0.0
  %v912 = vsel %vm910, %v907, 0.0
  %v913 = vadd.f32 %v911, %v912
  %v914 = vsel %vm910, %v908, 0.0
  %v915 = vadd.f32 %v913, %v914
  %v916 = vsel %vm910, %v909, 0.0
  %v917 = vadd.f32 %v915, %v916
  %918 = vadd.xlane.f32.xlu0 %v917
  %v919 = vpop.xlane.xlu0 %918
  %v920 = vrot.slane %v919, 4
  %v921 = vadd.f32 %v919, %v920
  %v922 = vrot.slane %v921, 2
  %v923 = vadd.f32 %v921, %v922
  %v924 = vrot.slane %v923, 1
  %v925 = vadd.f32 %v923, %v924
  %s926 = vtos %v925
  %v927 = vsel %vm910, %v898, 0.0
  %v928 = vsel %vm910, %v899, 0.0
  %v929 = vadd.f32 %v927, %v928
  %v930 = vsel %vm910, %v900, 0.0
  %v931 = vadd.f32 %v929, %v930
  %v932 = vsel %vm910, %v901, 0.0
  %v933 = vadd.f32 %v931, %v932
  %934 = vadd.xlane.f32.xlu0 %v933
  %v935 = vpop.xlane.xlu0 %934
  %v936 = vrot.slane %v935, 4
  %v937 = vadd.f32 %v935, %v936
  %v938 = vrot.slane %v937, 2
  %v939 = vadd.f32 %v937, %v938
  %v940 = vrot.slane %v939, 1
  %v941 = vadd.f32 %v939, %v940
  %s942 = vtos %v941
  %s943 = smul.f32 %s942, 2.0
  %s944 = smax.f32 %s943, 1.0
  %v945 = vsub.f32 0.0, %v880
  %v946 = vsub.f32 0.0, %v885
  %v947 = vsub.f32 0.0, %v890
  %v948 = vsub.f32 0.0, %v895
  %v949 = vld [vmem:[%s9] sm:$0xff]
  %v950 = vld [vmem:[%s9 + $0x8] sm:$0xff]
  %v951 = vld [vmem:[%s9 + $0x10] sm:$0xff]
  %v952 = vld [vmem:[%s9 + $0x18] sm:$0xff]
  %v953 = vmul.f32 %v945, %v949
  %v954 = vmul.f32 %v946, %v950
  %v955 = vmul.f32 %v947, %v951
  %v956 = vmul.f32 %v948, %v952
  %v957 = vmul.f32 %v953, 1.442695
  %v958 = vpow.pop %v957
  %v959 = vmul.f32 %v954, 1.442695
  %v960 = vpow.pop %v959
  %v961 = vmul.f32 %v955, 1.442695
  %v962 = vpow.pop %v961
  %v963 = vmul.f32 %v956, 1.442695
  %v964 = vpow.pop %v963
  %v965 = vmul.f32 %v958, %v898
  %v966 = vmul.f32 %v960, %v899
  %v967 = vmul.f32 %v962, %v900
  %v968 = vmul.f32 %v964, %v901
  %969 = vadd.xlane.f32.xlu0 %v927
  %v970 = vpop.xlane.xlu0 %969
  %971 = vadd.xlane.f32.xlu0 %v928
  %v972 = vpop.xlane.xlu0 %971
  %973 = vadd.xlane.f32.xlu0 %v930
  %v974 = vpop.xlane.xlu0 %973
  %975 = vadd.xlane.f32.xlu0 %v932
  %v976 = vpop.xlane.xlu0 %975
  %v977 = vsel %vm910, %v965, 0.0
  %978 = vadd.xlane.f32.xlu0 %v977
  %v979 = vpop.xlane.xlu0 %978
  %v980 = vsel %vm910, %v966, 0.0
  %981 = vadd.xlane.f32.xlu0 %v980
  %v982 = vpop.xlane.xlu0 %981
  %v983 = vsel %vm910, %v967, 0.0
  %984 = vadd.xlane.f32.xlu0 %v983
  %v985 = vpop.xlane.xlu0 %984
  %v986 = vsel %vm910, %v968, 0.0
  %987 = vadd.xlane.f32.xlu0 %v986
  %v988 = vpop.xlane.xlu0 %987
  %v989 = vadd.f32 %v970, 1e-06
  %v990 = vadd.f32 %v972, 1e-06
  %v991 = vadd.f32 %v974, 1e-06
  %v992 = vadd.f32 %v976, 1e-06
  %v993 = vrcp.pop %v989
  %v994 = vrcp.pop %v990
  %v995 = vrcp.pop %v991
  %v996 = vrcp.pop %v992
  %v997 = vmul.f32 %v979, %v993
  %v998 = vmul.f32 %v982, %v994
  %v999 = vmul.f32 %v985, %v995
  %v1000 = vmul.f32 %v988, %v996
  %v1001 = vmax.f32 %v997, 1e-06
  %v1002 = vmax.f32 %v998, 1e-06
  %v1003 = vmax.f32 %v999, 1e-06
  %v1004 = vmax.f32 %v1000, 1e-06
  %v1005 = vsel %vm261, %v902, 0.0
  %v1006 = vsel %vm261, %v903, 0.0
  %v1007 = vadd.f32 %v1005, %v1006
  %v1008 = vsel %vm261, %v904, 0.0
  %v1009 = vadd.f32 %v1007, %v1008
  %v1010 = vsel %vm261, %v905, 0.0
  %v1011 = vadd.f32 %v1009, %v1010
  %1012 = vadd.xlane.f32.xlu0 %v1011
  %v1013 = vpop.xlane.xlu0 %1012
  %v1014 = vrot.slane %v1013, 4
  %v1015 = vadd.f32 %v1013, %v1014
  %v1016 = vrot.slane %v1015, 2
  %v1017 = vadd.f32 %v1015, %v1016
  %v1018 = vrot.slane %v1017, 1
  %v1019 = vadd.f32 %v1017, %v1018
  %s1020 = vtos %v1019
  %s1021 = smax.f32 %s1020, 1.0
  %v1022 = vstv %s944
  %v1023 = vrcp.pop %v1022
  %s1024 = vtos %v1023
  %s1025 = smul.f32 %s926, %s1024
  %v1026 = vsub.f32 1.0, %v1001
  %v1027 = vsub.f32 1.0, %v1002
  %v1028 = vsub.f32 1.0, %v1003
  %v1029 = vsub.f32 1.0, %v1004
  %v1030 = vmul.f32 %v1026, %v902
  %v1031 = vmul.f32 %v1027, %v903
  %v1032 = vmul.f32 %v1028, %v904
  %v1033 = vmul.f32 %v1029, %v905
  %v1034 = vsel %vm261, %v1030, 0.0
  %v1035 = vsel %vm261, %v1031, 0.0
  %v1036 = vadd.f32 %v1034, %v1035
  %v1037 = vsel %vm261, %v1032, 0.0
  %v1038 = vadd.f32 %v1036, %v1037
  %v1039 = vsel %vm261, %v1033, 0.0
  %v1040 = vadd.f32 %v1038, %v1039
  %1041 = vadd.xlane.f32.xlu0 %v1040
  %v1042 = vpop.xlane.xlu0 %1041
  %v1043 = vrot.slane %v1042, 4
  %v1044 = vadd.f32 %v1042, %v1043
  %v1045 = vrot.slane %v1044, 2
  %v1046 = vadd.f32 %v1044, %v1045
  %v1047 = vrot.slane %v1046, 1
  %v1048 = vadd.f32 %v1046, %v1047
  %s1049 = vtos %v1048
  %v1050 = vstv %s1021
  %v1051 = vrcp.pop %v1050
  %s1052 = vtos %v1051
  %s1053 = smul.f32 %s1049, %s1052
  %v1054 = vstv %s944
  %v1055 = vrcp.pop %v1054
  %s1056 = vtos %v1055
  %s1057 = smul.f32 %s1053, %s1056
  %v1058 = vld [vmem:[%s12] sm:$0xff]
  %v1059 = vld [vmem:[%s12 + $0x8] sm:$0xff]
  %v1060 = vld [vmem:[%s12 + $0x10] sm:$0xff]
  %v1061 = vld [vmem:[%s12 + $0x18] sm:$0xff]
  %v1062 = vld [vmem:[%s13] sm:$0xff]
  %v1063 = vld [vmem:[%s13 + $0x8] sm:$0xff]
  %v1064 = vld [vmem:[%s13 + $0x10] sm:$0xff]
  %v1065 = vld [vmem:[%s13 + $0x18] sm:$0xff]
  %1066 = vset.pattern.permute.xlu0 0
  %1067 = vperm.xlu0 %1066, %v1062
  %v1068 = vpop.permute.xlu0 %1067
  %1069 = vset.pattern.permute.xlu0 0
  %1070 = vperm.xlu0 %1069, %v1063
  %v1071 = vpop.permute.xlu0 %1070
  %1072 = vset.pattern.permute.xlu0 0
  %1073 = vperm.xlu0 %1072, %v1064
  %v1074 = vpop.permute.xlu0 %1073
  %1075 = vset.pattern.permute.xlu0 0
  %1076 = vperm.xlu0 %1075, %v1065
  %v1077 = vpop.permute.xlu0 %1076
  %vm1078 = vcmp.eq.s32.totalorder %v61, %v1068
  %vm1079 = vcmp.eq.s32.totalorder %v61, %v1071
  %vm1080 = vcmp.eq.s32.totalorder %v61, %v1074
  %vm1081 = vcmp.eq.s32.totalorder %v61, %v1077
  %v1082 = vsel %vm1078, 1, 0
  %v1083 = vsel %vm1079, 1, 0
  %v1084 = vsel %vm1080, 1, 0
  %v1085 = vsel %vm1081, 1, 0
  %v1086 = vcvt.s32.f32 %v1082
  %v1087 = vcvt.s32.f32 %v1083
  %v1088 = vcvt.s32.f32 %v1084
  %v1089 = vcvt.s32.f32 %v1085
  %v1090 = vand.u32 2147483647, %v1058
  %v1091 = vand.u32 2147483647, %v1059
  %v1092 = vand.u32 2147483647, %v1060
  %v1093 = vand.u32 2147483647, %v1061
  %v1094 = vsub.f32 0.0, %v1090
  %v1095 = vsub.f32 0.0, %v1091
  %v1096 = vsub.f32 0.0, %v1092
  %v1097 = vsub.f32 0.0, %v1093
  %v1098 = vmul.f32 %v1094, 1.442695
  %v1099 = vpow.pop %v1098
  %v1100 = vmul.f32 %v1095, 1.442695
  %v1101 = vpow.pop %v1100
  %v1102 = vmul.f32 %v1096, 1.442695
  %v1103 = vpow.pop %v1102
  %v1104 = vmul.f32 %v1097, 1.442695
  %v1105 = vpow.pop %v1104
  %v1106 = vadd.f32 %v1099, 1.0
  %v1107 = vadd.f32 %v1101, 1.0
  %v1108 = vadd.f32 %v1103, 1.0
  %v1109 = vadd.f32 %v1105, 1.0
  %v1110 = vrcp.pop %v1106
  %v1111 = vmul.f32 1.0, %v1110
  %v1112 = vrcp.pop %v1107
  %v1113 = vmul.f32 1.0, %v1112
  %v1114 = vrcp.pop %v1108
  %v1115 = vmul.f32 1.0, %v1114
  %v1116 = vrcp.pop %v1109
  %v1117 = vmul.f32 1.0, %v1116
  %vm1118 = vcmp.ge.f32.partialorder %v1058, 0.0
  %vm1119 = vcmp.ge.f32.partialorder %v1059, 0.0
  %vm1120 = vcmp.ge.f32.partialorder %v1060, 0.0
  %vm1121 = vcmp.ge.f32.partialorder %v1061, 0.0
  %v1122 = vmul.f32 %v1099, %v1111
  %v1123 = vmul.f32 %v1101, %v1113
  %v1124 = vmul.f32 %v1103, %v1115
  %v1125 = vmul.f32 %v1105, %v1117
  %v1126 = vsel %vm1118, %v1111, %v1122
  %v1127 = vsel %vm1119, %v1113, %v1123
  %v1128 = vsel %vm1120, %v1115, %v1124
  %v1129 = vsel %vm1121, %v1117, %v1125
  %v1130 = vmax.f32 %v1058, 0.0
  %v1131 = vmax.f32 %v1059, 0.0
  %v1132 = vmax.f32 %v1060, 0.0
  %v1133 = vmax.f32 %v1061, 0.0
  %v1134 = vmul.f32 %v1058, %v1086
  %v1135 = vmul.f32 %v1059, %v1087
  %v1136 = vmul.f32 %v1060, %v1088
  %v1137 = vmul.f32 %v1061, %v1089
  %v1138 = vsub.f32 %v1130, %v1134
  %v1139 = vsub.f32 %v1131, %v1135
  %v1140 = vsub.f32 %v1132, %v1136
  %v1141 = vsub.f32 %v1133, %v1137
  %v1142 = vlog2.pop %v1106
  %v1143 = vmul.f32 %v1142, 0.6931472
  %v1144 = vlog2.pop %v1107
  %v1145 = vmul.f32 %v1144, 0.6931472
  %v1146 = vlog2.pop %v1108
  %v1147 = vmul.f32 %v1146, 0.6931472
  %v1148 = vlog2.pop %v1109
  %v1149 = vmul.f32 %v1148, 0.6931472
  %v1150 = vadd.f32 %v1138, %v1143
  %v1151 = vadd.f32 %v1139, %v1145
  %v1152 = vadd.f32 %v1140, %v1147
  %v1153 = vadd.f32 %v1141, %v1149
  %v1154 = vmul.f32 %v1126, %v1086
  %v1155 = vmul.f32 %v1127, %v1087
  %v1156 = vmul.f32 %v1128, %v1088
  %v1157 = vmul.f32 %v1129, %v1089
  %v1158 = vsub.f32 1.0, %v1126
  %v1159 = vsub.f32 1.0, %v1127
  %v1160 = vsub.f32 1.0, %v1128
  %v1161 = vsub.f32 1.0, %v1129
  %v1162 = vsub.f32 1.0, %v1086
  %v1163 = vsub.f32 1.0, %v1087
  %v1164 = vsub.f32 1.0, %v1088
  %v1165 = vsub.f32 1.0, %v1089
  %v1166 = vmul.f32 %v1158, %v1162
  %v1167 = vmul.f32 %v1159, %v1163
  %v1168 = vmul.f32 %v1160, %v1164
  %v1169 = vmul.f32 %v1161, %v1165
  %v1170 = vadd.f32 %v1154, %v1166
  %v1171 = vadd.f32 %v1155, %v1167
  %v1172 = vadd.f32 %v1156, %v1168
  %v1173 = vadd.f32 %v1157, %v1169
  %v1174 = vsub.f32 1.0, %v1170
  %v1175 = vsub.f32 1.0, %v1171
  %v1176 = vsub.f32 1.0, %v1172
  %v1177 = vsub.f32 1.0, %v1173
  %v1178 = vmul.f32 %v1086, 0.25
  %v1179 = vmul.f32 %v1087, 0.25
  %v1180 = vmul.f32 %v1088, 0.25
  %v1181 = vmul.f32 %v1089, 0.25
  %v1182 = vmul.f32 %v1162, 0.75
  %v1183 = vmul.f32 %v1163, 0.75
  %v1184 = vmul.f32 %v1164, 0.75
  %v1185 = vmul.f32 %v1165, 0.75
  %v1186 = vadd.f32 %v1178, %v1182
  %v1187 = vadd.f32 %v1179, %v1183
  %v1188 = vadd.f32 %v1180, %v1184
  %v1189 = vadd.f32 %v1181, %v1185
  %v1190 = vmul.f32 %v1186, %v1150
  %v1191 = vmul.f32 %v1187, %v1151
  %v1192 = vmul.f32 %v1188, %v1152
  %v1193 = vmul.f32 %v1189, %v1153
  %v1194 = vmul.f32 %v1190, %v1174
  %v1195 = vmul.f32 %v1191, %v1175
  %v1196 = vmul.f32 %v1192, %v1176
  %v1197 = vmul.f32 %v1193, %v1177
  %v1198 = vmul.f32 %v1194, %v1174
  %v1199 = vmul.f32 %v1195, %v1175
  %v1200 = vmul.f32 %v1196, %v1176
  %v1201 = vmul.f32 %v1197, %v1177
  %v1202 = vsel %vm206, %v1198, 0.0
  %v1203 = vsel %vm206, %v1199, 0.0
  %v1204 = vadd.f32 %v1202, %v1203
  %v1205 = vsel %vm206, %v1200, 0.0
  %v1206 = vadd.f32 %v1204, %v1205
  %v1207 = vsel %vm206, %v1201, 0.0
  %v1208 = vadd.f32 %v1206, %v1207
  %1209 = vadd.xlane.f32.xlu0 %v1208
  %v1210 = vpop.xlane.xlu0 %1209
  %v1211 = vrot.slane %v1210, 4
  %v1212 = vadd.f32 %v1210, %v1211
  %v1213 = vrot.slane %v1212, 2
  %v1214 = vadd.f32 %v1212, %v1213
  %v1215 = vrot.slane %v1214, 1
  %v1216 = vadd.f32 %v1214, %v1215
  %s1217 = vtos %v1216
  %v1218 = vstv %s1217
  %v1219 = vmul.f32 %v1218, %v55
  %v1220 = vld [vmem:[%s14] sm:$0xff]
  %v1221 = vld [vmem:[%s14 + $0x8] sm:$0xff]
  %v1222 = vld [vmem:[%s14 + $0x10] sm:$0xff]
  %v1223 = vld [vmem:[%s14 + $0x18] sm:$0xff]
  %v1224 = vld [vmem:[%s15] sm:$0xff]
  %v1225 = vld [vmem:[%s15 + $0x8] sm:$0xff]
  %v1226 = vld [vmem:[%s15 + $0x10] sm:$0xff]
  %v1227 = vld [vmem:[%s15 + $0x18] sm:$0xff]
  %v1228 = vsub.f32 %v1220, %v1224
  %v1229 = vsub.f32 %v1221, %v1225
  %v1230 = vsub.f32 %v1222, %v1226
  %v1231 = vsub.f32 %v1223, %v1227
  %v1232 = vand.u32 2147483647, %v1228
  %v1233 = vand.u32 2147483647, %v1229
  %v1234 = vand.u32 2147483647, %v1230
  %v1235 = vand.u32 2147483647, %v1231
  %v1236 = vsel %vm206, %v1232, 0.0
  %1237 = vadd.xlane.f32.xlu0 %v1236
  %v1238 = vpop.xlane.xlu0 %1237
  %v1239 = vsel %vm206, %v1233, 0.0
  %1240 = vadd.xlane.f32.xlu0 %v1239
  %v1241 = vpop.xlane.xlu0 %1240
  %v1242 = vsel %vm206, %v1234, 0.0
  %1243 = vadd.xlane.f32.xlu0 %v1242
  %v1244 = vpop.xlane.xlu0 %1243
  %v1245 = vsel %vm206, %v1235, 0.0
  %1246 = vadd.xlane.f32.xlu0 %v1245
  %v1247 = vpop.xlane.xlu0 %1246
  %v1248 = vmul.f32 %v1220, 0.5
  %v1249 = vmul.f32 %v1221, 0.5
  %v1250 = vmul.f32 %v1222, 0.5
  %v1251 = vmul.f32 %v1223, 0.5
  %1256 = vrot.lane.b32.xlu0 %v1248, 126
  %v1257 = vpop.permute.xlu0 %1256
  %1258 = vrot.lane.b32.xlu0 %v1249, 126
  %v1259 = vpop.permute.xlu0 %1258
  %1260 = vrot.lane.b32.xlu0 %v1250, 126
  %v1261 = vpop.permute.xlu0 %1260
  %1262 = vrot.lane.b32.xlu0 %v1251, 126
  %v1263 = vpop.permute.xlu0 %1262
  %v1268 = vsub.f32 %v1220, %v1257
  %v1269 = vsub.f32 %v1221, %v1259
  %v1270 = vsub.f32 %v1222, %v1261
  %v1271 = vsub.f32 %v1223, %v1263
  %v1272 = vadd.f32 %v1220, %v1257
  %v1273 = vadd.f32 %v1221, %v1259
  %v1274 = vadd.f32 %v1222, %v1261
  %v1275 = vadd.f32 %v1223, %v1263
  %v1276 = vmul.f32 %v1224, 0.5
  %v1277 = vmul.f32 %v1225, 0.5
  %v1278 = vmul.f32 %v1226, 0.5
  %v1279 = vmul.f32 %v1227, 0.5
  %1284 = vrot.lane.b32.xlu0 %v1276, 126
  %v1285 = vpop.permute.xlu0 %1284
  %1286 = vrot.lane.b32.xlu0 %v1277, 126
  %v1287 = vpop.permute.xlu0 %1286
  %1288 = vrot.lane.b32.xlu0 %v1278, 126
  %v1289 = vpop.permute.xlu0 %1288
  %1290 = vrot.lane.b32.xlu0 %v1279, 126
  %v1291 = vpop.permute.xlu0 %1290
  %v1296 = vsub.f32 %v1224, %v1285
  %v1297 = vsub.f32 %v1225, %v1287
  %v1298 = vsub.f32 %v1226, %v1289
  %v1299 = vsub.f32 %v1227, %v1291
  %v1300 = vadd.f32 %v1224, %v1285
  %v1301 = vadd.f32 %v1225, %v1287
  %v1302 = vadd.f32 %v1226, %v1289
  %v1303 = vadd.f32 %v1227, %v1291
  %v1304 = vsub.f32 %v1272, %v1268
  %v1305 = vsub.f32 %v1273, %v1269
  %v1306 = vsub.f32 %v1274, %v1270
  %v1307 = vsub.f32 %v1275, %v1271
  %1312 = vrot.lane.b32.xlu0 %v1304, 127
  %v1313 = vpop.permute.xlu0 %1312
  %1314 = vrot.lane.b32.xlu0 %v1305, 127
  %v1315 = vpop.permute.xlu0 %1314
  %1316 = vrot.lane.b32.xlu0 %v1306, 127
  %v1317 = vpop.permute.xlu0 %1316
  %1318 = vrot.lane.b32.xlu0 %v1307, 127
  %v1319 = vpop.permute.xlu0 %1318
  %v1324 = vmul.f32 %v1304, %v1313
  %v1325 = vmul.f32 %v1305, %v1315
  %v1326 = vmul.f32 %v1306, %v1317
  %v1327 = vmul.f32 %v1307, %v1319
  %v1328 = vsub.f32 %v1300, %v1296
  %v1329 = vsub.f32 %v1301, %v1297
  %v1330 = vsub.f32 %v1302, %v1298
  %v1331 = vsub.f32 %v1303, %v1299
  %1336 = vrot.lane.b32.xlu0 %v1328, 127
  %v1337 = vpop.permute.xlu0 %1336
  %1338 = vrot.lane.b32.xlu0 %v1329, 127
  %v1339 = vpop.permute.xlu0 %1338
  %1340 = vrot.lane.b32.xlu0 %v1330, 127
  %v1341 = vpop.permute.xlu0 %1340
  %1342 = vrot.lane.b32.xlu0 %v1331, 127
  %v1343 = vpop.permute.xlu0 %1342
  %v1348 = vmul.f32 %v1328, %v1337
  %v1349 = vmul.f32 %v1329, %v1339
  %v1350 = vmul.f32 %v1330, %v1341
  %v1351 = vmul.f32 %v1331, %v1343
  %v1352 = vmin.f32 %v1272, %v1300
  %v1353 = vmin.f32 %v1273, %v1301
  %v1354 = vmin.f32 %v1274, %v1302
  %v1355 = vmin.f32 %v1275, %v1303
  %v1356 = vmax.f32 %v1268, %v1296
  %v1357 = vmax.f32 %v1269, %v1297
  %v1358 = vmax.f32 %v1270, %v1298
  %v1359 = vmax.f32 %v1271, %v1299
  %v1360 = vsub.f32 %v1352, %v1356
  %v1361 = vsub.f32 %v1353, %v1357
  %v1362 = vsub.f32 %v1354, %v1358
  %v1363 = vsub.f32 %v1355, %v1359
  %v1364 = vmax.f32 %v1360, 0.0
  %v1365 = vmax.f32 %v1361, 0.0
  %v1366 = vmax.f32 %v1362, 0.0
  %v1367 = vmax.f32 %v1363, 0.0
  %1372 = vrot.lane.b32.xlu0 %v1364, 127
  %v1373 = vpop.permute.xlu0 %1372
  %1374 = vrot.lane.b32.xlu0 %v1365, 127
  %v1375 = vpop.permute.xlu0 %1374
  %1376 = vrot.lane.b32.xlu0 %v1366, 127
  %v1377 = vpop.permute.xlu0 %1376
  %1378 = vrot.lane.b32.xlu0 %v1367, 127
  %v1379 = vpop.permute.xlu0 %1378
  %v1384 = vmul.f32 %v1364, %v1373
  %v1385 = vmul.f32 %v1365, %v1375
  %v1386 = vmul.f32 %v1366, %v1377
  %v1387 = vmul.f32 %v1367, %v1379
  %v1388 = vadd.f32 %v1324, %v1348
  %v1389 = vadd.f32 %v1325, %v1349
  %v1390 = vadd.f32 %v1326, %v1350
  %v1391 = vadd.f32 %v1327, %v1351
  %v1392 = vsub.f32 %v1388, %v1384
  %v1393 = vsub.f32 %v1389, %v1385
  %v1394 = vsub.f32 %v1390, %v1386
  %v1395 = vsub.f32 %v1391, %v1387
  %v1396 = vadd.f32 %v1392, 1e-07
  %v1397 = vadd.f32 %v1393, 1e-07
  %v1398 = vadd.f32 %v1394, 1e-07
  %v1399 = vadd.f32 %v1395, 1e-07
  %v1400 = vrcp.pop %v1396
  %v1401 = vrcp.pop %v1397
  %v1402 = vrcp.pop %v1398
  %v1403 = vrcp.pop %v1399
  %v1404 = vmul.f32 %v1384, %v1400
  %v1405 = vmul.f32 %v1385, %v1401
  %v1406 = vmul.f32 %v1386, %v1402
  %v1407 = vmul.f32 %v1387, %v1403
  %v1408 = vmax.f32 %v1272, %v1300
  %v1409 = vmax.f32 %v1273, %v1301
  %v1410 = vmax.f32 %v1274, %v1302
  %v1411 = vmax.f32 %v1275, %v1303
  %v1412 = vmin.f32 %v1268, %v1296
  %v1413 = vmin.f32 %v1269, %v1297
  %v1414 = vmin.f32 %v1270, %v1298
  %v1415 = vmin.f32 %v1271, %v1299
  %v1416 = vsub.f32 %v1408, %v1412
  %v1417 = vsub.f32 %v1409, %v1413
  %v1418 = vsub.f32 %v1410, %v1414
  %v1419 = vsub.f32 %v1411, %v1415
  %1424 = vrot.lane.b32.xlu0 %v1416, 127
  %v1425 = vpop.permute.xlu0 %1424
  %1426 = vrot.lane.b32.xlu0 %v1417, 127
  %v1427 = vpop.permute.xlu0 %1426
  %1428 = vrot.lane.b32.xlu0 %v1418, 127
  %v1429 = vpop.permute.xlu0 %1428
  %1430 = vrot.lane.b32.xlu0 %v1419, 127
  %v1431 = vpop.permute.xlu0 %1430
  %v1436 = vmul.f32 %v1416, %v1425
  %v1437 = vmul.f32 %v1417, %v1427
  %v1438 = vmul.f32 %v1418, %v1429
  %v1439 = vmul.f32 %v1419, %v1431
  %v1440 = vsub.f32 %v1436, %v1392
  %v1441 = vsub.f32 %v1437, %v1393
  %v1442 = vsub.f32 %v1438, %v1394
  %v1443 = vsub.f32 %v1439, %v1395
  %v1444 = vadd.f32 %v1436, 1e-07
  %v1445 = vadd.f32 %v1437, 1e-07
  %v1446 = vadd.f32 %v1438, 1e-07
  %v1447 = vadd.f32 %v1439, 1e-07
  %v1448 = vrcp.pop %v1444
  %v1449 = vrcp.pop %v1445
  %v1450 = vrcp.pop %v1446
  %v1451 = vrcp.pop %v1447
  %v1452 = vmul.f32 %v1440, %v1448
  %v1453 = vmul.f32 %v1441, %v1449
  %v1454 = vmul.f32 %v1442, %v1450
  %v1455 = vmul.f32 %v1443, %v1451
  %v1456 = vsub.f32 %v1404, %v1452
  %v1457 = vsub.f32 %v1405, %v1453
  %v1458 = vsub.f32 %v1406, %v1454
  %v1459 = vsub.f32 %v1407, %v1455
  %v1460 = vsel %vm261, %v1238, 0.0
  %v1461 = vsel %vm261, %v1241, 0.0
  %v1462 = vadd.f32 %v1460, %v1461
  %v1463 = vsel %vm261, %v1244, 0.0
  %v1464 = vadd.f32 %v1462, %v1463
  %v1465 = vsel %vm261, %v1247, 0.0
  %v1466 = vadd.f32 %v1464, %v1465
  %1467 = vadd.xlane.f32.xlu0 %v1466
  %v1468 = vpop.xlane.xlu0 %1467
  %v1469 = vrot.slane %v1468, 4
  %v1470 = vadd.f32 %v1468, %v1469
  %v1471 = vrot.slane %v1470, 2
  %v1472 = vadd.f32 %v1470, %v1471
  %v1473 = vrot.slane %v1472, 1
  %v1474 = vadd.f32 %v1472, %v1473
  %s1475 = vtos %v1474
  %v1476 = vsub.f32 1.0, %v1456
  %v1477 = vsub.f32 1.0, %v1457
  %v1478 = vsub.f32 1.0, %v1458
  %v1479 = vsub.f32 1.0, %v1459
  %v1480 = vsel %vm261, %v1476, 0.0
  %v1481 = vsel %vm261, %v1477, 0.0
  %v1482 = vadd.f32 %v1480, %v1481
  %v1483 = vsel %vm261, %v1478, 0.0
  %v1484 = vadd.f32 %v1482, %v1483
  %v1485 = vsel %vm261, %v1479, 0.0
  %v1486 = vadd.f32 %v1484, %v1485
  %1487 = vadd.xlane.f32.xlu0 %v1486
  %v1488 = vpop.xlane.xlu0 %1487
  %v1489 = vrot.slane %v1488, 4
  %v1490 = vadd.f32 %v1488, %v1489
  %v1491 = vrot.slane %v1490, 2
  %v1492 = vadd.f32 %v1490, %v1491
  %v1493 = vrot.slane %v1492, 1
  %v1494 = vadd.f32 %v1492, %v1493
  %s1495 = vtos %v1494
  %v1496 = vstv %s1475
  %v1497 = vmul.f32 %v1496, %v55
  %v1498 = vstv %s1495
  %v1499 = vmul.f32 %v1498, %v55
  %vm1500 = vcmp.eq.s32.totalorder %v61, 0
  %1502 = vset.pattern.permute.xlu0 1
  %1503 = vperm.xlu0 %1502, %v224
  %v1504 = vpop.permute.xlu0 %1503
  %v1506 = vsel %vm1500, %v1504, 0.0
  %v1507 = vadd.f32 %v1506, 0.0
  %vm1508 = vcmp.eq.s32.totalorder %v61, 1
  %v1509 = vstv %s304
  %v1510 = vsel %vm1508, %v1509, 0.0
  %v1511 = vadd.f32 %v1507, %v1510
  %vm1512 = vcmp.eq.s32.totalorder %v61, 2
  %1514 = vset.pattern.permute.xlu0 0
  %1515 = vperm.xlu0 %1514, %v385
  %v1516 = vpop.permute.xlu0 %1515
  %v1518 = vsel %vm1512, %v1516, 0.0
  %v1519 = vadd.f32 %v1511, %v1518
  %vm1520 = vcmp.eq.s32.totalorder %v61, 3
  %1522 = vset.pattern.permute.xlu0 1
  %1523 = vperm.xlu0 %1522, %v671
  %v1524 = vpop.permute.xlu0 %1523
  %v1526 = vsel %vm1520, %v1524, 0.0
  %v1527 = vadd.f32 %v1519, %v1526
  %vm1528 = vcmp.eq.s32.totalorder %v61, 4
  %1530 = vset.pattern.permute.xlu0 1
  %1531 = vperm.xlu0 %1530, %v673
  %v1532 = vpop.permute.xlu0 %1531
  %v1534 = vsel %vm1528, %v1532, 0.0
  %v1535 = vadd.f32 %v1527, %v1534
  %vm1536 = vcmp.eq.s32.totalorder %v61, 5
  %v1537 = vstv %s1025
  %v1538 = vsel %vm1536, %v1537, 0.0
  %v1539 = vadd.f32 %v1535, %v1538
  %vm1540 = vcmp.eq.s32.totalorder %v61, 6
  %v1541 = vstv %s1057
  %v1542 = vsel %vm1540, %v1541, 0.0
  %v1543 = vadd.f32 %v1539, %v1542
  %vm1544 = vcmp.eq.s32.totalorder %v61, 7
  %1546 = vset.pattern.permute.xlu0 2
  %1547 = vperm.xlu0 %1546, %v1219
  %v1548 = vpop.permute.xlu0 %1547
  %v1550 = vsel %vm1544, %v1548, 0.0
  %v1551 = vadd.f32 %v1543, %v1550
  %vm1552 = vcmp.eq.s32.totalorder %v61, 8
  %1554 = vset.pattern.permute.xlu0 2
  %1555 = vperm.xlu0 %1554, %v1497
  %v1556 = vpop.permute.xlu0 %1555
  %v1558 = vsel %vm1552, %v1556, 0.0
  %v1559 = vadd.f32 %v1551, %v1558
  %vm1560 = vcmp.eq.s32.totalorder %v61, 9
  %1562 = vset.pattern.permute.xlu0 2
  %1563 = vperm.xlu0 %1562, %v1499
  %v1564 = vpop.permute.xlu0 %1563
  %v1566 = vsel %vm1560, %v1564, 0.0
  %v1567 = vadd.f32 %v1559, %v1566
  %1568 = vst [vmem:[%s16] sm:$0x1] %v1567
  // Predicated region
  $region66: #{_fused_criterion.1} parent=0 // pred_check
    _
  $region67: #{_fused_criterion.1} parent=0 // pred_check_branch
    %1570 = sbr.rel (0) target = $region69
  $region68: #{_fused_criterion.1} parent=0 // pred_region
    _
  $region69: #{_fused_criterion.1} parent=0 // pred_fallthru
    _
  // Predicated region
  $region70: #{_fused_criterion.1} parent=0 // pred_check
    _
  $region71: #{_fused_criterion.1} parent=0 // pred_check_branch
    %1572 = sbr.rel (0) target = $region73
  $region72: #{_fused_criterion.1} parent=0 // pred_region
    _
  $region73: #{_fused_criterion.1} parent=0 // pred_fallthru
    _

</llo_original>
